<compile_context>
chip_gen: v5e
topology: v5e:2x2
jax: 0.10.0
libtpu: 0.0.40
codegen_flags: <defaults>
</compile_context>

<pallas_src>
import functools

import jax
import jax.numpy as jnp
from jax.experimental import pallas as pl
from jax.experimental.pallas import tpu as pltpu


def _bert_attention_kernel(
    *refs,
    num_heads, head_dim, hidden, q_tile, eps, mask_mode, mask_heads, exp_dtype,
):
    x_ref, g_ref, be_ref, wqkv_ref, bqkv_ref, wo_ref, bo_ref = refs[:7]
    i = 7
    mask_ref = None
    if mask_mode != "none":
        mask_ref = refs[i]
        i += 1
    o_ref = refs[i]
    qkv_scr = refs[i + 1]   # (S, 3H) bf16 VMEM scratch (persists across q tiles)
    ctx_scr = refs[i + 2]   # (Tq, H) bf16 VMEM scratch

    H = hidden
    qi = pl.program_id(1)

    # --- once per batch element: LayerNorm + fused Q|K|V projection ---------
    # (softmax scaling is already folded into the Q columns of wqkv / bqkv)
    @pl.when(qi == 0)
    def _():
        x = x_ref[0].astype(jnp.float32)                      # (S, H) f32
        mu = jnp.mean(x, axis=-1, keepdims=True)
        var = jnp.mean((x - mu) ** 2, axis=-1, keepdims=True)
        xn = (x - mu) * jax.lax.rsqrt(var + eps)
        xn = xn * g_ref[...] + be_ref[...]                    # (S, H)
        qkv = jnp.dot(xn.astype(jnp.bfloat16), wqkv_ref[...],
                      preferred_element_type=jnp.float32) + bqkv_ref[...]
        qkv_scr[...] = qkv.astype(jnp.bfloat16)               # (S, 3H)

    q_off = pl.multiple_of(qi * q_tile, q_tile)

    # --- per-head attention on the current query tile ------------------------
    # Static Python loop so every lane offset is static (cheap minor-dim slices
    # of the VMEM scratch ref); each iteration ends in a ctx_scr store, so live
    # values stay bounded to one head.
    for h in range(num_heads):
        hm = h if mask_heads == num_heads else 0
        q_h = qkv_scr[pl.ds(q_off, q_tile), pl.ds(h * head_dim, head_dim)]
        k_h = qkv_scr[:, pl.ds(H + h * head_dim, head_dim)]
        v_h = qkv_scr[:, pl.ds(2 * H + h * head_dim, head_dim)]

        # (Tq, S) scores for ONE head; contraction over the shared minor dim
        # uses the MXU transposed-operand path (no explicit XLU transpose).
        s = jnp.einsum("qd,kd->qk", q_h, k_h,
                       preferred_element_type=jnp.float32)
        if mask_mode == "row":      # (1, mh, 1, S) f32 padding mask
            s = s + mask_ref[0, hm]                 # broadcast over query rows
        elif mask_mode == "full":   # (1, mh, Tq, S) bf16 mask
            s = s + mask_ref[0, hm].astype(jnp.float32)
        s = jnp.clip(s, -10000.0, 10000.0)

        # softmax; exp in bf16 on v6e/v7x (bf16 EUP), f32 on v4/v5e.
        m = jnp.max(s, axis=-1, keepdims=True)
        p = jnp.exp((s - m).astype(exp_dtype))
        l = jnp.sum(p.astype(jnp.float32), axis=-1, keepdims=True)
        inv_l = pl.reciprocal(l, approx=True)       # EUP slot
        # dropout(attn_probs): identity at inference.

        # Normalize AFTER the P·V matmul: (Tq, hd) multiplies instead of (Tq, S).
        ctx_h = jnp.dot(p.astype(jnp.bfloat16), v_h,
                        preferred_element_type=jnp.float32) * inv_l
        ctx_scr[:, pl.ds(h * head_dim, head_dim)] = ctx_h.astype(jnp.bfloat16)

    # --- single full-depth output projection (contraction K = H) ------------
    out = jnp.dot(ctx_scr[...], wo_ref[...],
                  preferred_element_type=jnp.float32) + bo_ref[...]
    # dropout(output): identity at inference.
    o_ref[0] = out.astype(o_ref.dtype)


def _choose_q_tile(S):
    # Tile the query axis only when the sequence is long enough for the (Tq, S)
    # score tile / (S, 3H) scratch to pressure VMEM (notably v7x's 64 MiB).
    if S <= 512:
        return S
    for t in (512, 256, 128):
        if S % t == 0:
            return t
    return S   # TODO(synk): ragged S would need a masked final query tile.


def _softmax_exp_dtype():
    # bf16 EUP exists on v6e/v7x only; keep f32 on v4/v5e (and when unknown).
    try:
        kind = jax.devices()[0].device_kind.lower()
    except Exception:
        return jnp.float32
    return jnp.bfloat16 if ("v6" in kind or "v7" in kind) else jnp.float32


def _vmem_limit_bytes(S, Tq, H, io_bytes, mask_mode, mask_heads):
    bf16, f32 = 2, 4
    weights = (3 * H * H + H * H) * bf16 + 6 * H * f32          # wqkv, wo, biases, LN
    io = 2 * S * H * io_bytes + 2 * Tq * H * io_bytes           # x / out, double-buffered
    scratch = S * 3 * H * bf16 + Tq * H * bf16                  # qkv + ctx scratch
    if mask_mode == "row":
        mask_b = 2 * mask_heads * S * f32
    elif mask_mode == "full":
        mask_b = 2 * mask_heads * Tq * S * bf16
    else:
        mask_b = 0
    interm = S * H * f32 + S * 3 * H * f32 + 3 * Tq * S * f32 + 2 * Tq * H * f32
    est = 2 * weights + io + scratch + mask_b + interm          # generous: 2x weights
    cap = 64 << 20                                              # fine for 128 MiB v5e/v6e
    try:
        # v7x has only 64 MiB physical VMEM: leave headroom (~48 MiB cap there).
        cap = min(cap, int(pltpu.get_tpu_info().vmem_capacity_bytes) * 3 // 4)
    except Exception:
        pass
    return int(min(cap, max(32 << 20, 2 * est)))


def bert_attention(x, params, mask=None, *, num_heads):
    B, S, H = x.shape
    assert H % num_heads == 0
    head_dim = H // num_heads
    scaling = head_dim ** (-0.5)
    Tq = _choose_q_tile(S)
    n_q = S // Tq

    gamma = params["ln_gamma"].reshape(1, H).astype(jnp.float32)
    beta = params["ln_beta"].reshape(1, H).astype(jnp.float32)

    # PyTorch Linear is x @ W^T + b (W: (out, in)); pre-transpose, fuse Q|K|V and
    # fold the 1/sqrt(head_dim) scaling into the Q weight + bias.  Weights are
    # pre-cast to bf16 so the DMA'd bytes are already bf16.
    wqkv = jnp.concatenate(
        [(params["wq"] * scaling).T, params["wk"].T, params["wv"].T], axis=1
    ).astype(jnp.bfloat16)                                                    # (H, 3H)
    bqkv = jnp.concatenate(
        [params["bq"] * scaling, params["bk"], params["bv"]]
    ).reshape(1, 3 * H).astype(jnp.float32)                                   # (1, 3H)
    wo = params["wo"].T.astype(jnp.bfloat16)                                  # (H, H)
    bo = params["bo"].reshape(1, H).astype(jnp.float32)                       # (1, H)

    # --- mask normalization to (B, mh, mq, S), mh in {1, nh}, mq in {1, S} ----
    mask_mode, mask_heads, mask_arr = "none", 1, None
    if mask is not None:
        m = jnp.asarray(mask)
        m = m.reshape((1,) * (4 - m.ndim) + m.shape)
        mb, mh, mq, mk = m.shape
        assert mb in (1, B) and mh in (1, num_heads) and mq in (1, S) and mk in (1, S)
        m = jnp.broadcast_to(m, (B, mh, mq, S))
        mask_heads = mh
        if mq == 1:
            # Padding-style mask: one row per (batch, head); broadcast over the
            # query axis inside the kernel — never expanded to (S, S).
            mask_mode, mask_arr = "row", m.astype(jnp.float32)
        else:
            # Genuine 2-D mask: DMA in bf16, upcast inside the kernel.
            mask_mode, mask_arr = "full", m.astype(jnp.bfloat16)

    kernel = functools.partial(
        _bert_attention_kernel,
        num_heads=num_heads, head_dim=head_dim, hidden=H, q_tile=Tq, eps=1e-6,
        mask_mode=mask_mode, mask_heads=mask_heads, exp_dtype=_softmax_exp_dtype(),
    )
    vmem_limit = _vmem_limit_bytes(
        S, Tq, H, jnp.dtype(x.dtype).itemsize, mask_mode, mask_heads)

    def _call(single_buffer_weights):
        def const_spec(shape):
            # Constant-index weight/bias blocks: single-buffer when supported.
            if single_buffer_weights:
                return pl.BlockSpec(shape, lambda b, q: (0,) * len(shape),
                                    pipeline_mode=pl.Buffered(1))
            return pl.BlockSpec(shape, lambda b, q: (0,) * len(shape))

        in_specs = [
            pl.BlockSpec((1, S, H), lambda b, q: (b, 0, 0)),       # x (constant over q)
            const_spec((1, H)), const_spec((1, H)),                # LN gamma, beta
            const_spec((H, 3 * H)), const_spec((1, 3 * H)),        # fused Wqkv, bqkv
            const_spec((H, H)), const_spec((1, H)),                # Wo, bo
        ]
        args = [x, gamma, beta, wqkv, bqkv, wo, bo]
        if mask_mode == "row":
            in_specs.append(pl.BlockSpec((1, mask_heads, 1, S),
                                         lambda b, q: (b, 0, 0, 0)))
            args.append(mask_arr)
        elif mask_mode == "full":
            in_specs.append(pl.BlockSpec((1, mask_heads, Tq, S),
                                         lambda b, q: (b, 0, q, 0)))
            args.append(mask_arr)

        return pl.pallas_call(
            kernel,
            out_shape=jax.ShapeDtypeStruct((B, S, H), x.dtype),
            grid_spec=pltpu.PrefetchScalarGridSpec(
                num_scalar_prefetch=0,
                grid=(B, n_q),
                in_specs=in_specs,
                out_specs=pl.BlockSpec((1, Tq, H), lambda b, q: (b, q, 0)),
                scratch_shapes=[pltpu.VMEM((S, 3 * H), jnp.bfloat16),
                                pltpu.VMEM((Tq, H), jnp.bfloat16)],
            ),
            # Query axis is "arbitrary": the QKV scratch computed at q == 0 is
            # reused by the later query tiles of the same batch element.
            compiler_params=pltpu.CompilerParams(
                dimension_semantics=("parallel", "arbitrary"),
                vmem_limit_bytes=vmem_limit,
            ),
        )(*args)

    try:
        return _call(single_buffer_weights=True)
    except Exception:
        # pl.Buffered(1) not accepted by this jax/Mosaic version — fall back to
        # default double-buffered weights (correctness unaffected).  NOTE: this
        # fallback only works because pallas_call executes eagerly here; under
        # an outer jax.jit the rejection would surface at compile time instead.
        return _call(single_buffer_weights=False)


def init_params(key, hidden):
    # xavier_uniform_(gain=0.1): bound = 0.1 * sqrt(6 / (fan_in + fan_out)), biases zero.
    bound = 0.1 * (6.0 / (hidden + hidden)) ** 0.5
    ks = jax.random.split(key, 4)
    p = {
        "ln_gamma": jnp.ones((hidden,), jnp.float32),
        "ln_beta": jnp.zeros((hidden,), jnp.float32),
    }
    for name, k in zip(("wq", "wk", "wv", "wo"), ks):
        p[name] = jax.random.uniform(k, (hidden, hidden), jnp.float32, -bound, bound)
        p["b" + name[1]] = jnp.zeros((hidden,), jnp.float32)
    return p


def reference(x, params, mask, num_heads):
    # Pure-JAX f32 reference for a correctness sanity check.
    B, S, H = x.shape
    hd = H // num_heads
    mu = jnp.mean(x, -1, keepdims=True)
    var = jnp.mean((x - mu) ** 2, -1, keepdims=True)
    xn = (x - mu) / jnp.sqrt(var + 1e-6) * params["ln_gamma"] + params["ln_beta"]
    q = xn @ params["wq"].T + params["bq"]
    k = xn @ params["wk"].T + params["bk"]
    v = xn @ params["wv"].T + params["bv"]

    def split(t):
        return t.reshape(B, S, num_heads, hd).transpose(0, 2, 1, 3)

    q, k, v = split(q), split(k), split(v)
    s = jnp.einsum("bhqd,bhkd->bhqk", q, k) * hd ** (-0.5)
    if mask is not None:
        s = s + mask
    s = jnp.clip(s, -10000.0, 10000.0)
    p = jax.nn.softmax(s, axis=-1)
    ctx = jnp.einsum("bhqk,bhkd->bhqd", p, v).transpose(0, 2, 1, 3).reshape(B, S, H)
    return ctx @ params["wo"].T + params["bo"]


if __name__ == "__main__":
    B, S, H, NH = 2, 8, 32, 4
    key = jax.random.PRNGKey(0)
    kx, kp = jax.random.split(key)
    x = jax.random.normal(kx, (B, S, H), jnp.float32)
    params = init_params(kp, H)

    # 1) no mask: mask-free kernel variant (no mask DMA'd at all).
    out = jax.block_until_ready(bert_attention(x, params, mask=None, num_heads=NH))
    ref = reference(x, params, None, NH)
    assert out.shape == (B, S, H)
    assert jnp.allclose(out, ref, atol=5e-3, rtol=1e-2), "no-mask mismatch vs reference"

    # 2) padding-style additive mask (B, 1, 1, S): stays (B,1,1,S), row-broadcast in-kernel.
    valid = jnp.array([S, S - 2])[:, None, None, None]
    pad_mask = jnp.where(jnp.arange(S)[None, None, None, :] < valid, 0.0, -10000.0)
    out_p = jax.block_until_ready(bert_attention(x, params, mask=pad_mask, num_heads=NH))
    ref_p = reference(x, params, pad_mask, NH)
    assert jnp.allclose(out_p, ref_p, atol=5e-3, rtol=1e-2), "padding-mask mismatch"

    # 3) full 2-D (causal) mask (1, 1, S, S): DMA'd in bf16, upcast in-kernel.
    causal = jnp.where(jnp.arange(S)[:, None] >= jnp.arange(S)[None, :], 0.0, -10000.0)
    causal = causal[None, None]
    out_c = jax.block_until_ready(bert_attention(x, params, mask=causal, num_heads=NH))
    ref_c = reference(x, params, causal, NH)
    assert jnp.allclose(out_c, ref_c, atol=5e-3, rtol=1e-2), "causal-mask mismatch"

    print("KERNEL_OK")
</pallas_src>

<mosaic_0001>
module attributes {stable_mosaic.version = 11 : i64} {
  func.func @_bert_attention_kernel(%arg0: i32, %arg1: i32, %arg2: memref<1x8x32xf32, #tpu.memory_space<vmem>>, %arg3: memref<1x32xf32, #tpu.memory_space<vmem>>, %arg4: memref<1x32xf32, #tpu.memory_space<vmem>>, %arg5: memref<32x96xbf16, #tpu.memory_space<vmem>>, %arg6: memref<1x96xf32, #tpu.memory_space<vmem>>, %arg7: memref<32x32xbf16, #tpu.memory_space<vmem>>, %arg8: memref<1x32xf32, #tpu.memory_space<vmem>>, %arg9: memref<1x8x32xf32, #tpu.memory_space<vmem>>, %arg10: memref<8x96xbf16, #tpu.memory_space<vmem>>, %arg11: memref<8x32xbf16, #tpu.memory_space<vmem>>) attributes {dimension_semantics = [#tpu.dimension_semantics<parallel>, #tpu.dimension_semantics<arbitrary>], iteration_bounds = array<i64: 2, 1>, scalar_prefetch = 0 : i64, scratch_operands = 2 : i64, tpu.core_type = #tpu.core_type<tc>, window_params = [{transform_indices = @transform_0, window_bounds = array<i64: 1, 8, 32>}, {pipeline_mode = #tpu.pipeline_mode<synchronous>, transform_indices = @transform_1, window_bounds = array<i64: 1, 32>}, {pipeline_mode = #tpu.pipeline_mode<synchronous>, transform_indices = @transform_2, window_bounds = array<i64: 1, 32>}, {pipeline_mode = #tpu.pipeline_mode<synchronous>, transform_indices = @transform_3, window_bounds = array<i64: 32, 96>}, {pipeline_mode = #tpu.pipeline_mode<synchronous>, transform_indices = @transform_4, window_bounds = array<i64: 1, 96>}, {pipeline_mode = #tpu.pipeline_mode<synchronous>, transform_indices = @transform_5, window_bounds = array<i64: 32, 32>}, {pipeline_mode = #tpu.pipeline_mode<synchronous>, transform_indices = @transform_6, window_bounds = array<i64: 1, 32>}, {transform_indices = @transform_7, window_bounds = array<i64: 1, 8, 32>}]} {
    %c0_i32 = arith.constant 0 : i32
    %0 = arith.cmpi eq, %arg1, %c0_i32 : i32
    %1 = arith.extui %0 : i1 to i32
    %c0_i32_0 = arith.constant 0 : i32
    %2 = arith.cmpi ne, %1, %c0_i32_0 : i32
    scf.if %2 {
      %c0_50 = arith.constant 0 : index
      %c0_51 = arith.constant 0 : index
      %c0_52 = arith.constant 0 : index
      %106 = vector.load %arg2[%c0_50, %c0_51, %c0_52] : memref<1x8x32xf32, #tpu.memory_space<vmem>>, vector<1x8x32xf32>
      %107 = vector.shape_cast %106 : vector<1x8x32xf32> to vector<8x32xf32>
      %cst_53 = arith.constant dense<0.000000e+00> : vector<8xf32>
      %108 = vector.multi_reduction <add>, %107, %cst_53 [1] : vector<8x32xf32> to vector<8xf32>
      %109 = vector.shape_cast %108 : vector<8xf32> to vector<8x1xf32>
      %cst_54 = arith.constant 3.200000e+01 : f32
      %110 = vector.broadcast %cst_54 : f32 to vector<8x1xf32>
      %111 = arith.divf %109, %110 : vector<8x1xf32>
      %112 = vector.broadcast %111 : vector<8x1xf32> to vector<8x32xf32>
      %113 = arith.subf %107, %112 : vector<8x32xf32>
      %114 = arith.mulf %113, %113 : vector<8x32xf32>
      %cst_55 = arith.constant dense<0.000000e+00> : vector<8xf32>
      %115 = vector.multi_reduction <add>, %114, %cst_55 [1] : vector<8x32xf32> to vector<8xf32>
      %116 = vector.shape_cast %115 : vector<8xf32> to vector<8x1xf32>
      %cst_56 = arith.constant 3.200000e+01 : f32
      %117 = vector.broadcast %cst_56 : f32 to vector<8x1xf32>
      %118 = arith.divf %116, %117 : vector<8x1xf32>
      %119 = vector.broadcast %111 : vector<8x1xf32> to vector<8x32xf32>
      %120 = arith.subf %107, %119 : vector<8x32xf32>
      %cst_57 = arith.constant 9.99999997E-7 : f32
      %121 = vector.broadcast %cst_57 : f32 to vector<8x1xf32>
      %122 = arith.addf %118, %121 : vector<8x1xf32>
      %123 = math.rsqrt %122 : vector<8x1xf32>
      %124 = vector.broadcast %123 : vector<8x1xf32> to vector<8x32xf32>
      %125 = arith.mulf %120, %124 : vector<8x32xf32>
      %c0_58 = arith.constant 0 : index
      %c0_59 = arith.constant 0 : index
      %126 = vector.load %arg3[%c0_58, %c0_59] : memref<1x32xf32, #tpu.memory_space<vmem>>, vector<1x32xf32>
      %127 = vector.broadcast %126 : vector<1x32xf32> to vector<8x32xf32>
      %128 = arith.mulf %125, %127 : vector<8x32xf32>
      %c0_60 = arith.constant 0 : index
      %c0_61 = arith.constant 0 : index
      %129 = vector.load %arg4[%c0_60, %c0_61] : memref<1x32xf32, #tpu.memory_space<vmem>>, vector<1x32xf32>
      %130 = vector.broadcast %129 : vector<1x32xf32> to vector<8x32xf32>
      %131 = arith.addf %128, %130 : vector<8x32xf32>
      %132 = arith.truncf %131 : vector<8x32xf32> to vector<8x32xbf16>
      %c0_62 = arith.constant 0 : index
      %c0_63 = arith.constant 0 : index
      %133 = vector.load %arg5[%c0_62, %c0_63] : memref<32x96xbf16, #tpu.memory_space<vmem>>, vector<32x96xbf16>
      %cst_64 = arith.constant dense<0.000000e+00> : vector<8x96xf32>
      %134 = tpu.matmul %132, %133, %cst_64 {dimension_numbers = #tpu.dot_dimension_numbers<[1], [0], [0], [1], [0, 0, 1, 1], [], []>} : vector<8x32xbf16>, vector<32x96xbf16>, vector<8x96xf32> -> vector<8x96xf32>
      %c0_65 = arith.constant 0 : index
      %c0_66 = arith.constant 0 : index
      %135 = vector.load %arg6[%c0_65, %c0_66] : memref<1x96xf32, #tpu.memory_space<vmem>>, vector<1x96xf32>
      %136 = vector.broadcast %135 : vector<1x96xf32> to vector<8x96xf32>
      %137 = arith.addf %134, %136 : vector<8x96xf32>
      %138 = arith.truncf %137 : vector<8x96xf32> to vector<8x96xbf16>
      %c0_67 = arith.constant 0 : index
      %c0_68 = arith.constant 0 : index
      %139 = vector.load %arg10[%c0_67, %c0_68] : memref<8x96xbf16, #tpu.memory_space<vmem>>, vector<8x96xbf16>
      tpu.vector_store %arg10[%c0_67, %c0_68], %138 {strides = array<i32>} : memref<8x96xbf16, #tpu.memory_space<vmem>>, vector<8x96xbf16>,
    } else {
    }
    %c8_i32 = arith.constant 8 : i32
    %3 = arith.muli %arg1, %c8_i32 : i32
    %4 = tpu.assume_multiple %3, 8 : i32
    %5 = arith.index_cast %4 : i32 to index
    %c0 = arith.constant 0 : index
    %6 = vector.load %arg10[%5, %c0] : memref<8x96xbf16, #tpu.memory_space<vmem>>, vector<8x8xbf16>
    %c0_1 = arith.constant 0 : index
    %c32 = arith.constant 32 : index
    %7 = vector.load %arg10[%c0_1, %c32] : memref<8x96xbf16, #tpu.memory_space<vmem>>, vector<8x8xbf16>
    %c0_2 = arith.constant 0 : index
    %c64 = arith.constant 64 : index
    %8 = vector.load %arg10[%c0_2, %c64] : memref<8x96xbf16, #tpu.memory_space<vmem>>, vector<8x8xbf16>
    "tpu.trace_start"() <{level = 10 : i32, message = "qd,kd->qk"}> : () -> ()
    %cst = arith.constant dense<0.000000e+00> : vector<8x8xf32>
    %9 = tpu.matmul %6, %7, %cst {dimension_numbers = #tpu.dot_dimension_numbers<[1], [1], [0], [0], [0, 0, 1, 0], [], []>} : vector<8x8xbf16>, vector<8x8xbf16>, vector<8x8xf32> -> vector<8x8xf32>
    %cst_3 = arith.constant -1.000000e+04 : f32
    %cst_4 = arith.constant 1.000000e+04 : f32
    "tpu.trace_stop"() : () -> ()
    %10 = vector.broadcast %cst_3 : f32 to vector<8x8xf32>
    %11 = arith.maximumf %10, %9 : vector<8x8xf32>
    %12 = vector.broadcast %cst_4 : f32 to vector<8x8xf32>
    %13 = arith.minimumf %12, %11 : vector<8x8xf32>
    %cst_5 = arith.constant dense<0xFF800000> : vector<8xf32>
    %14 = vector.multi_reduction <maximumf>, %13, %cst_5 [1] : vector<8x8xf32> to vector<8xf32>
    %15 = vector.shape_cast %14 : vector<8xf32> to vector<8x1xf32>
    %16 = vector.broadcast %15 : vector<8x1xf32> to vector<8x8xf32>
    %17 = arith.subf %13, %16 : vector<8x8xf32>
    %18 = math.exp %17 : vector<8x8xf32>
    %cst_6 = arith.constant dense<0.000000e+00> : vector<8xf32>
    %19 = vector.multi_reduction <add>, %18, %cst_6 [1] : vector<8x8xf32> to vector<8xf32>
    %20 = vector.shape_cast %19 : vector<8xf32> to vector<8x1xf32>
    %21 = tpu.reciprocal %20 {approx = true} : vector<8x1xf32> -> vector<8x1xf32>
    %22 = arith.truncf %18 : vector<8x8xf32> to vector<8x8xbf16>
    %cst_7 = arith.constant dense<0.000000e+00> : vector<8x8xf32>
    %23 = tpu.matmul %22, %8, %cst_7 {dimension_numbers = #tpu.dot_dimension_numbers<[1], [0], [0], [1], [0, 0, 1, 1], [], []>} : vector<8x8xbf16>, vector<8x8xbf16>, vector<8x8xf32> -> vector<8x8xf32>
    %24 = vector.broadcast %21 : vector<8x1xf32> to vector<8x8xf32>
    %25 = arith.mulf %23, %24 : vector<8x8xf32>
    %26 = arith.truncf %25 : vector<8x8xf32> to vector<8x8xbf16>
    %c0_8 = arith.constant 0 : index
    %c0_9 = arith.constant 0 : index
    %27 = vector.load %arg11[%c0_8, %c0_9] : memref<8x32xbf16, #tpu.memory_space<vmem>>, vector<8x8xbf16>
    tpu.vector_store %arg11[%c0_8, %c0_9], %26 {strides = array<i32>} : memref<8x32xbf16, #tpu.memory_space<vmem>>, vector<8x8xbf16>,
    %28 = arith.index_cast %4 : i32 to index
    %c8 = arith.constant 8 : index
    %29 = vector.load %arg10[%28, %c8] : memref<8x96xbf16, #tpu.memory_space<vmem>>, vector<8x8xbf16>
    %c0_10 = arith.constant 0 : index
    %c40 = arith.constant 40 : index
    %30 = vector.load %arg10[%c0_10, %c40] : memref<8x96xbf16, #tpu.memory_space<vmem>>, vector<8x8xbf16>
    %c0_11 = arith.constant 0 : index
    %c72 = arith.constant 72 : index
    %31 = vector.load %arg10[%c0_11, %c72] : memref<8x96xbf16, #tpu.memory_space<vmem>>, vector<8x8xbf16>
    "tpu.trace_start"() <{level = 10 : i32, message = "qd,kd->qk"}> : () -> ()
    %cst_12 = arith.constant dense<0.000000e+00> : vector<8x8xf32>
    %32 = tpu.matmul %29, %30, %cst_12 {dimension_numbers = #tpu.dot_dimension_numbers<[1], [1], [0], [0], [0, 0, 1, 0], [], []>} : vector<8x8xbf16>, vector<8x8xbf16>, vector<8x8xf32> -> vector<8x8xf32>
    %cst_13 = arith.constant -1.000000e+04 : f32
    %cst_14 = arith.constant 1.000000e+04 : f32
    "tpu.trace_stop"() : () -> ()
    %33 = vector.broadcast %cst_13 : f32 to vector<8x8xf32>
    %34 = arith.maximumf %33, %32 : vector<8x8xf32>
    %35 = vector.broadcast %cst_14 : f32 to vector<8x8xf32>
    %36 = arith.minimumf %35, %34 : vector<8x8xf32>
    %cst_15 = arith.constant dense<0xFF800000> : vector<8xf32>
    %37 = vector.multi_reduction <maximumf>, %36, %cst_15 [1] : vector<8x8xf32> to vector<8xf32>
    %38 = vector.shape_cast %37 : vector<8xf32> to vector<8x1xf32>
    %39 = vector.broadcast %38 : vector<8x1xf32> to vector<8x8xf32>
    %40 = arith.subf %36, %39 : vector<8x8xf32>
    %41 = math.exp %40 : vector<8x8xf32>
    %cst_16 = arith.constant dense<0.000000e+00> : vector<8xf32>
    %42 = vector.multi_reduction <add>, %41, %cst_16 [1] : vector<8x8xf32> to vector<8xf32>
    %43 = vector.shape_cast %42 : vector<8xf32> to vector<8x1xf32>
    %44 = tpu.reciprocal %43 {approx = true} : vector<8x1xf32> -> vector<8x1xf32>
    %45 = arith.truncf %41 : vector<8x8xf32> to vector<8x8xbf16>
    %cst_17 = arith.constant dense<0.000000e+00> : vector<8x8xf32>
    %46 = tpu.matmul %45, %31, %cst_17 {dimension_numbers = #tpu.dot_dimension_numbers<[1], [0], [0], [1], [0, 0, 1, 1], [], []>} : vector<8x8xbf16>, vector<8x8xbf16>, vector<8x8xf32> -> vector<8x8xf32>
    %47 = vector.broadcast %44 : vector<8x1xf32> to vector<8x8xf32>
    %48 = arith.mulf %46, %47 : vector<8x8xf32>
    %49 = arith.truncf %48 : vector<8x8xf32> to vector<8x8xbf16>
    %c0_18 = arith.constant 0 : index
    %c8_19 = arith.constant 8 : index
    %50 = vector.load %arg11[%c0_18, %c8_19] : memref<8x32xbf16, #tpu.memory_space<vmem>>, vector<8x8xbf16>
    tpu.vector_store %arg11[%c0_18, %c8_19], %49 {strides = array<i32>} : memref<8x32xbf16, #tpu.memory_space<vmem>>, vector<8x8xbf16>,
    %51 = arith.index_cast %4 : i32 to index
    %c16 = arith.constant 16 : index
    %52 = vector.load %arg10[%51, %c16] : memref<8x96xbf16, #tpu.memory_space<vmem>>, vector<8x8xbf16>
    %c0_20 = arith.constant 0 : index
    %c48 = arith.constant 48 : index
    %53 = vector.load %arg10[%c0_20, %c48] : memref<8x96xbf16, #tpu.memory_space<vmem>>, vector<8x8xbf16>
    %c0_21 = arith.constant 0 : index
    %c80 = arith.constant 80 : index
    %54 = vector.load %arg10[%c0_21, %c80] : memref<8x96xbf16, #tpu.memory_space<vmem>>, vector<8x8xbf16>
    "tpu.trace_start"() <{level = 10 : i32, message = "qd,kd->qk"}> : () -> ()
    %cst_22 = arith.constant dense<0.000000e+00> : vector<8x8xf32>
    %55 = tpu.matmul %52, %53, %cst_22 {dimension_numbers = #tpu.dot_dimension_numbers<[1], [1], [0], [0], [0, 0, 1, 0], [], []>} : vector<8x8xbf16>, vector<8x8xbf16>, vector<8x8xf32> -> vector<8x8xf32>
    %cst_23 = arith.constant -1.000000e+04 : f32
    %cst_24 = arith.constant 1.000000e+04 : f32
    "tpu.trace_stop"() : () -> ()
    %56 = vector.broadcast %cst_23 : f32 to vector<8x8xf32>
    %57 = arith.maximumf %56, %55 : vector<8x8xf32>
    %58 = vector.broadcast %cst_24 : f32 to vector<8x8xf32>
    %59 = arith.minimumf %58, %57 : vector<8x8xf32>
    %cst_25 = arith.constant dense<0xFF800000> : vector<8xf32>
    %60 = vector.multi_reduction <maximumf>, %59, %cst_25 [1] : vector<8x8xf32> to vector<8xf32>
    %61 = vector.shape_cast %60 : vector<8xf32> to vector<8x1xf32>
    %62 = vector.broadcast %61 : vector<8x1xf32> to vector<8x8xf32>
    %63 = arith.subf %59, %62 : vector<8x8xf32>
    %64 = math.exp %63 : vector<8x8xf32>
    %cst_26 = arith.constant dense<0.000000e+00> : vector<8xf32>
    %65 = vector.multi_reduction <add>, %64, %cst_26 [1] : vector<8x8xf32> to vector<8xf32>
    %66 = vector.shape_cast %65 : vector<8xf32> to vector<8x1xf32>
    %67 = tpu.reciprocal %66 {approx = true} : vector<8x1xf32> -> vector<8x1xf32>
    %68 = arith.truncf %64 : vector<8x8xf32> to vector<8x8xbf16>
    %cst_27 = arith.constant dense<0.000000e+00> : vector<8x8xf32>
    %69 = tpu.matmul %68, %54, %cst_27 {dimension_numbers = #tpu.dot_dimension_numbers<[1], [0], [0], [1], [0, 0, 1, 1], [], []>} : vector<8x8xbf16>, vector<8x8xbf16>, vector<8x8xf32> -> vector<8x8xf32>
    %70 = vector.broadcast %67 : vector<8x1xf32> to vector<8x8xf32>
    %71 = arith.mulf %69, %70 : vector<8x8xf32>
    %72 = arith.truncf %71 : vector<8x8xf32> to vector<8x8xbf16>
    %c0_28 = arith.constant 0 : index
    %c16_29 = arith.constant 16 : index
    %73 = vector.load %arg11[%c0_28, %c16_29] : memref<8x32xbf16, #tpu.memory_space<vmem>>, vector<8x8xbf16>
    tpu.vector_store %arg11[%c0_28, %c16_29], %72 {strides = array<i32>} : memref<8x32xbf16, #tpu.memory_space<vmem>>, vector<8x8xbf16>,
    %74 = arith.index_cast %4 : i32 to index
    %c24 = arith.constant 24 : index
    %75 = vector.load %arg10[%74, %c24] : memref<8x96xbf16, #tpu.memory_space<vmem>>, vector<8x8xbf16>
    %c0_30 = arith.constant 0 : index
    %c56 = arith.constant 56 : index
    %76 = vector.load %arg10[%c0_30, %c56] : memref<8x96xbf16, #tpu.memory_space<vmem>>, vector<8x8xbf16>
    %c0_31 = arith.constant 0 : index
    %c88 = arith.constant 88 : index
    %77 = vector.load %arg10[%c0_31, %c88] : memref<8x96xbf16, #tpu.memory_space<vmem>>, vector<8x8xbf16>
    "tpu.trace_start"() <{level = 10 : i32, message = "qd,kd->qk"}> : () -> ()
    %cst_32 = arith.constant dense<0.000000e+00> : vector<8x8xf32>
    %78 = tpu.matmul %75, %76, %cst_32 {dimension_numbers = #tpu.dot_dimension_numbers<[1], [1], [0], [0], [0, 0, 1, 0], [], []>} : vector<8x8xbf16>, vector<8x8xbf16>, vector<8x8xf32> -> vector<8x8xf32>
    %cst_33 = arith.constant -1.000000e+04 : f32
    %cst_34 = arith.constant 1.000000e+04 : f32
    "tpu.trace_stop"() : () -> ()
    %79 = vector.broadcast %cst_33 : f32 to vector<8x8xf32>
    %80 = arith.maximumf %79, %78 : vector<8x8xf32>
    %81 = vector.broadcast %cst_34 : f32 to vector<8x8xf32>
    %82 = arith.minimumf %81, %80 : vector<8x8xf32>
    %cst_35 = arith.constant dense<0xFF800000> : vector<8xf32>
    %83 = vector.multi_reduction <maximumf>, %82, %cst_35 [1] : vector<8x8xf32> to vector<8xf32>
    %84 = vector.shape_cast %83 : vector<8xf32> to vector<8x1xf32>
    %85 = vector.broadcast %84 : vector<8x1xf32> to vector<8x8xf32>
    %86 = arith.subf %82, %85 : vector<8x8xf32>
    %87 = math.exp %86 : vector<8x8xf32>
    %cst_36 = arith.constant dense<0.000000e+00> : vector<8xf32>
    %88 = vector.multi_reduction <add>, %87, %cst_36 [1] : vector<8x8xf32> to vector<8xf32>
    %89 = vector.shape_cast %88 : vector<8xf32> to vector<8x1xf32>
    %90 = tpu.reciprocal %89 {approx = true} : vector<8x1xf32> -> vector<8x1xf32>
    %91 = arith.truncf %87 : vector<8x8xf32> to vector<8x8xbf16>
    %cst_37 = arith.constant dense<0.000000e+00> : vector<8x8xf32>
    %92 = tpu.matmul %91, %77, %cst_37 {dimension_numbers = #tpu.dot_dimension_numbers<[1], [0], [0], [1], [0, 0, 1, 1], [], []>} : vector<8x8xbf16>, vector<8x8xbf16>, vector<8x8xf32> -> vector<8x8xf32>
    %93 = vector.broadcast %90 : vector<8x1xf32> to vector<8x8xf32>
    %94 = arith.mulf %92, %93 : vector<8x8xf32>
    %95 = arith.truncf %94 : vector<8x8xf32> to vector<8x8xbf16>
    %c0_38 = arith.constant 0 : index
    %c24_39 = arith.constant 24 : index
    %96 = vector.load %arg11[%c0_38, %c24_39] : memref<8x32xbf16, #tpu.memory_space<vmem>>, vector<8x8xbf16>
    tpu.vector_store %arg11[%c0_38, %c24_39], %95 {strides = array<i32>} : memref<8x32xbf16, #tpu.memory_space<vmem>>, vector<8x8xbf16>,
    %c0_40 = arith.constant 0 : index
    %c0_41 = arith.constant 0 : index
    %97 = vector.load %arg11[%c0_40, %c0_41] : memref<8x32xbf16, #tpu.memory_space<vmem>>, vector<8x32xbf16>
    %c0_42 = arith.constant 0 : index
    %c0_43 = arith.constant 0 : index
    %98 = vector.load %arg7[%c0_42, %c0_43] : memref<32x32xbf16, #tpu.memory_space<vmem>>, vector<32x32xbf16>
    %cst_44 = arith.constant dense<0.000000e+00> : vector<8x32xf32>
    %99 = tpu.matmul %97, %98, %cst_44 {dimension_numbers = #tpu.dot_dimension_numbers<[1], [0], [0], [1], [0, 0, 1, 1], [], []>} : vector<8x32xbf16>, vector<32x32xbf16>, vector<8x32xf32> -> vector<8x32xf32>
    %c0_45 = arith.constant 0 : index
    %c0_46 = arith.constant 0 : index
    %100 = vector.load %arg8[%c0_45, %c0_46] : memref<1x32xf32, #tpu.memory_space<vmem>>, vector<1x32xf32>
    %101 = vector.broadcast %100 : vector<1x32xf32> to vector<8x32xf32>
    %102 = arith.addf %99, %101 : vector<8x32xf32>
    %c0_47 = arith.constant 0 : index
    %c0_48 = arith.constant 0 : index
    %c0_49 = arith.constant 0 : index
    %103 = vector.load %arg9[%c0_47, %c0_48, %c0_49] : memref<1x8x32xf32, #tpu.memory_space<vmem>>, vector<1x8x32xf32>
    %104 = vector.shape_cast %103 : vector<1x8x32xf32> to vector<8x32xf32>
    %105 = vector.shape_cast %102 : vector<8x32xf32> to vector<1x8x32xf32>
    tpu.vector_store %arg9[%c0_47, %c0_48, %c0_49], %105 {strides = array<i32>} : memref<1x8x32xf32, #tpu.memory_space<vmem>>, vector<1x8x32xf32>,
    return
  }
  func.func @transform_0(%arg0: i32, %arg1: i32) -> (i32, i32, i32) {
    %c0_i32 = arith.constant 0 : i32
    %c0_i32_0 = arith.constant 0 : i32
    %c0_i32_1 = arith.constant 0 : i32
    return %arg0, %c0_i32, %c0_i32_0 : i32, i32, i32
  }
  func.func @transform_1(%arg0: i32, %arg1: i32) -> (i32, i32) {
    %c0_i32 = arith.constant 0 : i32
    %c0_i32_0 = arith.constant 0 : i32
    %c0_i32_1 = arith.constant 0 : i32
    return %c0_i32, %c0_i32_0 : i32, i32
  }
  func.func @transform_2(%arg0: i32, %arg1: i32) -> (i32, i32) {
    %c0_i32 = arith.constant 0 : i32
    %c0_i32_0 = arith.constant 0 : i32
    %c0_i32_1 = arith.constant 0 : i32
    return %c0_i32, %c0_i32_0 : i32, i32
  }
  func.func @transform_3(%arg0: i32, %arg1: i32) -> (i32, i32) {
    %c0_i32 = arith.constant 0 : i32
    %c0_i32_0 = arith.constant 0 : i32
    %c0_i32_1 = arith.constant 0 : i32
    return %c0_i32, %c0_i32_0 : i32, i32
  }
  func.func @transform_4(%arg0: i32, %arg1: i32) -> (i32, i32) {
    %c0_i32 = arith.constant 0 : i32
    %c0_i32_0 = arith.constant 0 : i32
    %c0_i32_1 = arith.constant 0 : i32
    return %c0_i32, %c0_i32_0 : i32, i32
  }
  func.func @transform_5(%arg0: i32, %arg1: i32) -> (i32, i32) {
    %c0_i32 = arith.constant 0 : i32
    %c0_i32_0 = arith.constant 0 : i32
    %c0_i32_1 = arith.constant 0 : i32
    return %c0_i32, %c0_i32_0 : i32, i32
  }
  func.func @transform_6(%arg0: i32, %arg1: i32) -> (i32, i32) {
    %c0_i32 = arith.constant 0 : i32
    %c0_i32_0 = arith.constant 0 : i32
    %c0_i32_1 = arith.constant 0 : i32
    return %c0_i32, %c0_i32_0 : i32, i32
  }
  func.func @transform_7(%arg0: i32, %arg1: i32) -> (i32, i32, i32) {
    %c0_i32 = arith.constant 0 : i32
    %c0_i32_0 = arith.constant 0 : i32
    return %arg0, %arg1, %c0_i32 : i32, i32, i32
  }
}

module attributes {stable_mosaic.version = 11 : i64} {
  func.func @_bert_attention_kernel(%arg0: i32, %arg1: i32, %arg2: memref<1x8x32xf32, #tpu.memory_space<vmem>>, %arg3: memref<1x32xf32, #tpu.memory_space<vmem>>, %arg4: memref<1x32xf32, #tpu.memory_space<vmem>>, %arg5: memref<32x96xbf16, #tpu.memory_space<vmem>>, %arg6: memref<1x96xf32, #tpu.memory_space<vmem>>, %arg7: memref<32x32xbf16, #tpu.memory_space<vmem>>, %arg8: memref<1x32xf32, #tpu.memory_space<vmem>>, %arg9: memref<1x8x32xf32, #tpu.memory_space<vmem>>, %arg10: memref<8x96xbf16, #tpu.memory_space<vmem>>, %arg11: memref<8x32xbf16, #tpu.memory_space<vmem>>) attributes {dimension_semantics = [#tpu.dimension_semantics<parallel>, #tpu.dimension_semantics<arbitrary>], iteration_bounds = array<i64: 2, 1>, scalar_prefetch = 0 : i64, scratch_operands = 2 : i64, tpu.core_type = #tpu.core_type<tc>, window_params = [{transform_indices = @transform_0, window_bounds = array<i64: 1, 8, 32>}, {pipeline_mode = #tpu.pipeline_mode<synchronous>, transform_indices = @transform_1, window_bounds = array<i64: 1, 32>}, {pipeline_mode = #tpu.pipeline_mode<synchronous>, transform_indices = @transform_2, window_bounds = array<i64: 1, 32>}, {pipeline_mode = #tpu.pipeline_mode<synchronous>, transform_indices = @transform_3, window_bounds = array<i64: 32, 96>}, {pipeline_mode = #tpu.pipeline_mode<synchronous>, transform_indices = @transform_4, window_bounds = array<i64: 1, 96>}, {pipeline_mode = #tpu.pipeline_mode<synchronous>, transform_indices = @transform_5, window_bounds = array<i64: 32, 32>}, {pipeline_mode = #tpu.pipeline_mode<synchronous>, transform_indices = @transform_6, window_bounds = array<i64: 1, 32>}, {transform_indices = @transform_7, window_bounds = array<i64: 1, 8, 32>}]} {
    %c0_i32 = arith.constant 0 : i32
    %0 = arith.cmpi eq, %arg1, %c0_i32 : i32
    %1 = arith.extui %0 : i1 to i32
    %c0_i32_0 = arith.constant 0 : i32
    %2 = arith.cmpi ne, %1, %c0_i32_0 : i32
    scf.if %2 {
      %c0_50 = arith.constant 0 : index
      %c0_51 = arith.constant 0 : index
      %c0_52 = arith.constant 0 : index
      %106 = vector.load %arg2[%c0_50, %c0_51, %c0_52] : memref<1x8x32xf32, #tpu.memory_space<vmem>>, vector<1x8x32xf32>
      %107 = vector.shape_cast %106 : vector<1x8x32xf32> to vector<8x32xf32>
      %cst_53 = arith.constant dense<0.000000e+00> : vector<8xf32>
      %108 = vector.multi_reduction <add>, %107, %cst_53 [1] : vector<8x32xf32> to vector<8xf32>
      %109 = vector.shape_cast %108 : vector<8xf32> to vector<8x1xf32>
      %cst_54 = arith.constant 3.200000e+01 : f32
      %110 = vector.broadcast %cst_54 : f32 to vector<8x1xf32>
      %111 = arith.divf %109, %110 : vector<8x1xf32>
      %112 = vector.broadcast %111 : vector<8x1xf32> to vector<8x32xf32>
      %113 = arith.subf %107, %112 : vector<8x32xf32>
      %114 = arith.mulf %113, %113 : vector<8x32xf32>
      %cst_55 = arith.constant dense<0.000000e+00> : vector<8xf32>
      %115 = vector.multi_reduction <add>, %114, %cst_55 [1] : vector<8x32xf32> to vector<8xf32>
      %116 = vector.shape_cast %115 : vector<8xf32> to vector<8x1xf32>
      %cst_56 = arith.constant 3.200000e+01 : f32
      %117 = vector.broadcast %cst_56 : f32 to vector<8x1xf32>
      %118 = arith.divf %116, %117 : vector<8x1xf32>
      %119 = vector.broadcast %111 : vector<8x1xf32> to vector<8x32xf32>
      %120 = arith.subf %107, %119 : vector<8x32xf32>
      %cst_57 = arith.constant 9.99999997E-7 : f32
      %121 = vector.broadcast %cst_57 : f32 to vector<8x1xf32>
      %122 = arith.addf %118, %121 : vector<8x1xf32>
      %123 = math.rsqrt %122 : vector<8x1xf32>
      %124 = vector.broadcast %123 : vector<8x1xf32> to vector<8x32xf32>
      %125 = arith.mulf %120, %124 : vector<8x32xf32>
      %c0_58 = arith.constant 0 : index
      %c0_59 = arith.constant 0 : index
      %126 = vector.load %arg3[%c0_58, %c0_59] : memref<1x32xf32, #tpu.memory_space<vmem>>, vector<1x32xf32>
      %127 = vector.broadcast %126 : vector<1x32xf32> to vector<8x32xf32>
      %128 = arith.mulf %125, %127 : vector<8x32xf32>
      %c0_60 = arith.constant 0 : index
      %c0_61 = arith.constant 0 : index
      %129 = vector.load %arg4[%c0_60, %c0_61] : memref<1x32xf32, #tpu.memory_space<vmem>>, vector<1x32xf32>
      %130 = vector.broadcast %129 : vector<1x32xf32> to vector<8x32xf32>
      %131 = arith.addf %128, %130 : vector<8x32xf32>
      %132 = arith.truncf %131 : vector<8x32xf32> to vector<8x32xbf16>
      %c0_62 = arith.constant 0 : index
      %c0_63 = arith.constant 0 : index
      %133 = vector.load %arg5[%c0_62, %c0_63] : memref<32x96xbf16, #tpu.memory_space<vmem>>, vector<32x96xbf16>
      %cst_64 = arith.constant dense<0.000000e+00> : vector<8x96xf32>
      %134 = tpu.matmul %132, %133, %cst_64 {dimension_numbers = #tpu.dot_dimension_numbers<[1], [0], [0], [1], [0, 0, 1, 1], [], []>} : vector<8x32xbf16>, vector<32x96xbf16>, vector<8x96xf32> -> vector<8x96xf32>
      %c0_65 = arith.constant 0 : index
      %c0_66 = arith.constant 0 : index
      %135 = vector.load %arg6[%c0_65, %c0_66] : memref<1x96xf32, #tpu.memory_space<vmem>>, vector<1x96xf32>
      %136 = vector.broadcast %135 : vector<1x96xf32> to vector<8x96xf32>
      %137 = arith.addf %134, %136 : vector<8x96xf32>
      %138 = arith.truncf %137 : vector<8x96xf32> to vector<8x96xbf16>
      %c0_67 = arith.constant 0 : index
      %c0_68 = arith.constant 0 : index
      %139 = vector.load %arg10[%c0_67, %c0_68] : memref<8x96xbf16, #tpu.memory_space<vmem>>, vector<8x96xbf16>
      tpu.vector_store %arg10[%c0_67, %c0_68], %138 {strides = array<i32>} : memref<8x96xbf16, #tpu.memory_space<vmem>>, vector<8x96xbf16>,
    } else {
    }
    %c8_i32 = arith.constant 8 : i32
    %3 = arith.muli %arg1, %c8_i32 : i32
    %4 = tpu.assume_multiple %3, 8 : i32
    %5 = arith.index_cast %4 : i32 to index
    %c0 = arith.constant 0 : index
    %6 = vector.load %arg10[%5, %c0] : memref<8x96xbf16, #tpu.memory_space<vmem>>, vector<8x8xbf16>
    %c0_1 = arith.constant 0 : index
    %c32 = arith.constant 32 : index
    %7 = vector.load %arg10[%c0_1, %c32] : memref<8x96xbf16, #tpu.memory_space<vmem>>, vector<8x8xbf16>
    %c0_2 = arith.constant 0 : index
    %c64 = arith.constant 64 : index
    %8 = vector.load %arg10[%c0_2, %c64] : memref<8x96xbf16, #tpu.memory_space<vmem>>, vector<8x8xbf16>
    "tpu.trace_start"() <{level = 10 : i32, message = "qd,kd->qk"}> : () -> ()
    %cst = arith.constant dense<0.000000e+00> : vector<8x8xf32>
    %9 = tpu.matmul %6, %7, %cst {dimension_numbers = #tpu.dot_dimension_numbers<[1], [1], [0], [0], [0, 0, 1, 0], [], []>} : vector<8x8xbf16>, vector<8x8xbf16>, vector<8x8xf32> -> vector<8x8xf32>
    %cst_3 = arith.constant -1.000000e+04 : f32
    %cst_4 = arith.constant 1.000000e+04 : f32
    "tpu.trace_stop"() : () -> ()
    %10 = vector.broadcast %cst_3 : f32 to vector<8x8xf32>
    %11 = arith.maximumf %10, %9 : vector<8x8xf32>
    %12 = vector.broadcast %cst_4 : f32 to vector<8x8xf32>
    %13 = arith.minimumf %12, %11 : vector<8x8xf32>
    %cst_5 = arith.constant dense<0xFF800000> : vector<8xf32>
    %14 = vector.multi_reduction <maximumf>, %13, %cst_5 [1] : vector<8x8xf32> to vector<8xf32>
    %15 = vector.shape_cast %14 : vector<8xf32> to vector<8x1xf32>
    %16 = vector.broadcast %15 : vector<8x1xf32> to vector<8x8xf32>
    %17 = arith.subf %13, %16 : vector<8x8xf32>
    %18 = math.exp %17 : vector<8x8xf32>
    %cst_6 = arith.constant dense<0.000000e+00> : vector<8xf32>
    %19 = vector.multi_reduction <add>, %18, %cst_6 [1] : vector<8x8xf32> to vector<8xf32>
    %20 = vector.shape_cast %19 : vector<8xf32> to vector<8x1xf32>
    %21 = tpu.reciprocal %20 {approx = true} : vector<8x1xf32> -> vector<8x1xf32>
    %22 = arith.truncf %18 : vector<8x8xf32> to vector<8x8xbf16>
    %cst_7 = arith.constant dense<0.000000e+00> : vector<8x8xf32>
    %23 = tpu.matmul %22, %8, %cst_7 {dimension_numbers = #tpu.dot_dimension_numbers<[1], [0], [0], [1], [0, 0, 1, 1], [], []>} : vector<8x8xbf16>, vector<8x8xbf16>, vector<8x8xf32> -> vector<8x8xf32>
    %24 = vector.broadcast %21 : vector<8x1xf32> to vector<8x8xf32>
    %25 = arith.mulf %23, %24 : vector<8x8xf32>
    %26 = arith.truncf %25 : vector<8x8xf32> to vector<8x8xbf16>
    %c0_8 = arith.constant 0 : index
    %c0_9 = arith.constant 0 : index
    %27 = vector.load %arg11[%c0_8, %c0_9] : memref<8x32xbf16, #tpu.memory_space<vmem>>, vector<8x8xbf16>
    tpu.vector_store %arg11[%c0_8, %c0_9], %26 {strides = array<i32>} : memref<8x32xbf16, #tpu.memory_space<vmem>>, vector<8x8xbf16>,
    %28 = arith.index_cast %4 : i32 to index
    %c8 = arith.constant 8 : index
    %29 = vector.load %arg10[%28, %c8] : memref<8x96xbf16, #tpu.memory_space<vmem>>, vector<8x8xbf16>
    %c0_10 = arith.constant 0 : index
    %c40 = arith.constant 40 : index
    %30 = vector.load %arg10[%c0_10, %c40] : memref<8x96xbf16, #tpu.memory_space<vmem>>, vector<8x8xbf16>
    %c0_11 = arith.constant 0 : index
    %c72 = arith.constant 72 : index
    %31 = vector.load %arg10[%c0_11, %c72] : memref<8x96xbf16, #tpu.memory_space<vmem>>, vector<8x8xbf16>
    "tpu.trace_start"() <{level = 10 : i32, message = "qd,kd->qk"}> : () -> ()
    %cst_12 = arith.constant dense<0.000000e+00> : vector<8x8xf32>
    %32 = tpu.matmul %29, %30, %cst_12 {dimension_numbers = #tpu.dot_dimension_numbers<[1], [1], [0], [0], [0, 0, 1, 0], [], []>} : vector<8x8xbf16>, vector<8x8xbf16>, vector<8x8xf32> -> vector<8x8xf32>
    %cst_13 = arith.constant -1.000000e+04 : f32
    %cst_14 = arith.constant 1.000000e+04 : f32
    "tpu.trace_stop"() : () -> ()
    %33 = vector.broadcast %cst_13 : f32 to vector<8x8xf32>
    %34 = arith.maximumf %33, %32 : vector<8x8xf32>
    %35 = vector.broadcast %cst_14 : f32 to vector<8x8xf32>
    %36 = arith.minimumf %35, %34 : vector<8x8xf32>
    %cst_15 = arith.constant dense<0xFF800000> : vector<8xf32>
    %37 = vector.multi_reduction <maximumf>, %36, %cst_15 [1] : vector<8x8xf32> to vector<8xf32>
    %38 = vector.shape_cast %37 : vector<8xf32> to vector<8x1xf32>
    %39 = vector.broadcast %38 : vector<8x1xf32> to vector<8x8xf32>
    %40 = arith.subf %36, %39 : vector<8x8xf32>
    %41 = math.exp %40 : vector<8x8xf32>
    %cst_16 = arith.constant dense<0.000000e+00> : vector<8xf32>
    %42 = vector.multi_reduction <add>, %41, %cst_16 [1] : vector<8x8xf32> to vector<8xf32>
    %43 = vector.shape_cast %42 : vector<8xf32> to vector<8x1xf32>
    %44 = tpu.reciprocal %43 {approx = true} : vector<8x1xf32> -> vector<8x1xf32>
    %45 = arith.truncf %41 : vector<8x8xf32> to vector<8x8xbf16>
    %cst_17 = arith.constant dense<0.000000e+00> : vector<8x8xf32>
    %46 = tpu.matmul %45, %31, %cst_17 {dimension_numbers = #tpu.dot_dimension_numbers<[1], [0], [0], [1], [0, 0, 1, 1], [], []>} : vector<8x8xbf16>, vector<8x8xbf16>, vector<8x8xf32> -> vector<8x8xf32>
    %47 = vector.broadcast %44 : vector<8x1xf32> to vector<8x8xf32>
    %48 = arith.mulf %46, %47 : vector<8x8xf32>
    %49 = arith.truncf %48 : vector<8x8xf32> to vector<8x8xbf16>
    %c0_18 = arith.constant 0 : index
    %c8_19 = arith.constant 8 : index
    %50 = vector.load %arg11[%c0_18, %c8_19] : memref<8x32xbf16, #tpu.memory_space<vmem>>, vector<8x8xbf16>
    tpu.vector_store %arg11[%c0_18, %c8_19], %49 {strides = array<i32>} : memref<8x32xbf16, #tpu.memory_space<vmem>>, vector<8x8xbf16>,
    %51 = arith.index_cast %4 : i32 to index
    %c16 = arith.constant 16 : index
    %52 = vector.load %arg10[%51, %c16] : memref<8x96xbf16, #tpu.memory_space<vmem>>, vector<8x8xbf16>
    %c0_20 = arith.constant 0 : index
    %c48 = arith.constant 48 : index
    %53 = vector.load %arg10[%c0_20, %c48] : memref<8x96xbf16, #tpu.memory_space<vmem>>, vector<8x8xbf16>
    %c0_21 = arith.constant 0 : index
    %c80 = arith.constant 80 : index
    %54 = vector.load %arg10[%c0_21, %c80] : memref<8x96xbf16, #tpu.memory_space<vmem>>, vector<8x8xbf16>
    "tpu.trace_start"() <{level = 10 : i32, message = "qd,kd->qk"}> : () -> ()
    %cst_22 = arith.constant dense<0.000000e+00> : vector<8x8xf32>
    %55 = tpu.matmul %52, %53, %cst_22 {dimension_numbers = #tpu.dot_dimension_numbers<[1], [1], [0], [0], [0, 0, 1, 0], [], []>} : vector<8x8xbf16>, vector<8x8xbf16>, vector<8x8xf32> -> vector<8x8xf32>
    %cst_23 = arith.constant -1.000000e+04 : f32
    %cst_24 = arith.constant 1.000000e+04 : f32
    "tpu.trace_stop"() : () -> ()
    %56 = vector.broadcast %cst_23 : f32 to vector<8x8xf32>
    %57 = arith.maximumf %56, %55 : vector<8x8xf32>
    %58 = vector.broadcast %cst_24 : f32 to vector<8x8xf32>
    %59 = arith.minimumf %58, %57 : vector<8x8xf32>
    %cst_25 = arith.constant dense<0xFF800000> : vector<8xf32>
    %60 = vector.multi_reduction <maximumf>, %59, %cst_25 [1] : vector<8x8xf32> to vector<8xf32>
    %61 = vector.shape_cast %60 : vector<8xf32> to vector<8x1xf32>
    %62 = vector.broadcast %61 : vector<8x1xf32> to vector<8x8xf32>
    %63 = arith.subf %59, %62 : vector<8x8xf32>
    %64 = math.exp %63 : vector<8x8xf32>
    %cst_26 = arith.constant dense<0.000000e+00> : vector<8xf32>
    %65 = vector.multi_reduction <add>, %64, %cst_26 [1] : vector<8x8xf32> to vector<8xf32>
    %66 = vector.shape_cast %65 : vector<8xf32> to vector<8x1xf32>
    %67 = tpu.reciprocal %66 {approx = true} : vector<8x1xf32> -> vector<8x1xf32>
    %68 = arith.truncf %64 : vector<8x8xf32> to vector<8x8xbf16>
    %cst_27 = arith.constant dense<0.000000e+00> : vector<8x8xf32>
    %69 = tpu.matmul %68, %54, %cst_27 {dimension_numbers = #tpu.dot_dimension_numbers<[1], [0], [0], [1], [0, 0, 1, 1], [], []>} : vector<8x8xbf16>, vector<8x8xbf16>, vector<8x8xf32> -> vector<8x8xf32>
    %70 = vector.broadcast %67 : vector<8x1xf32> to vector<8x8xf32>
    %71 = arith.mulf %69, %70 : vector<8x8xf32>
    %72 = arith.truncf %71 : vector<8x8xf32> to vector<8x8xbf16>
    %c0_28 = arith.constant 0 : index
    %c16_29 = arith.constant 16 : index
    %73 = vector.load %arg11[%c0_28, %c16_29] : memref<8x32xbf16, #tpu.memory_space<vmem>>, vector<8x8xbf16>
    tpu.vector_store %arg11[%c0_28, %c16_29], %72 {strides = array<i32>} : memref<8x32xbf16, #tpu.memory_space<vmem>>, vector<8x8xbf16>,
    %74 = arith.index_cast %4 : i32 to index
    %c24 = arith.constant 24 : index
    %75 = vector.load %arg10[%74, %c24] : memref<8x96xbf16, #tpu.memory_space<vmem>>, vector<8x8xbf16>
    %c0_30 = arith.constant 0 : index
    %c56 = arith.constant 56 : index
    %76 = vector.load %arg10[%c0_30, %c56] : memref<8x96xbf16, #tpu.memory_space<vmem>>, vector<8x8xbf16>
    %c0_31 = arith.constant 0 : index
    %c88 = arith.constant 88 : index
    %77 = vector.load %arg10[%c0_31, %c88] : memref<8x96xbf16, #tpu.memory_space<vmem>>, vector<8x8xbf16>
    "tpu.trace_start"() <{level = 10 : i32, message = "qd,kd->qk"}> : () -> ()
    %cst_32 = arith.constant dense<0.000000e+00> : vector<8x8xf32>
    %78 = tpu.matmul %75, %76, %cst_32 {dimension_numbers = #tpu.dot_dimension_numbers<[1], [1], [0], [0], [0, 0, 1, 0], [], []>} : vector<8x8xbf16>, vector<8x8xbf16>, vector<8x8xf32> -> vector<8x8xf32>
    %cst_33 = arith.constant -1.000000e+04 : f32
    %cst_34 = arith.constant 1.000000e+04 : f32
    "tpu.trace_stop"() : () -> ()
    %79 = vector.broadcast %cst_33 : f32 to vector<8x8xf32>
    %80 = arith.maximumf %79, %78 : vector<8x8xf32>
    %81 = vector.broadcast %cst_34 : f32 to vector<8x8xf32>
    %82 = arith.minimumf %81, %80 : vector<8x8xf32>
    %cst_35 = arith.constant dense<0xFF800000> : vector<8xf32>
    %83 = vector.multi_reduction <maximumf>, %82, %cst_35 [1] : vector<8x8xf32> to vector<8xf32>
    %84 = vector.shape_cast %83 : vector<8xf32> to vector<8x1xf32>
    %85 = vector.broadcast %84 : vector<8x1xf32> to vector<8x8xf32>
    %86 = arith.subf %82, %85 : vector<8x8xf32>
    %87 = math.exp %86 : vector<8x8xf32>
    %cst_36 = arith.constant dense<0.000000e+00> : vector<8xf32>
    %88 = vector.multi_reduction <add>, %87, %cst_36 [1] : vector<8x8xf32> to vector<8xf32>
    %89 = vector.shape_cast %88 : vector<8xf32> to vector<8x1xf32>
    %90 = tpu.reciprocal %89 {approx = true} : vector<8x1xf32> -> vector<8x1xf32>
    %91 = arith.truncf %87 : vector<8x8xf32> to vector<8x8xbf16>
    %cst_37 = arith.constant dense<0.000000e+00> : vector<8x8xf32>
    %92 = tpu.matmul %91, %77, %cst_37 {dimension_numbers = #tpu.dot_dimension_numbers<[1], [0], [0], [1], [0, 0, 1, 1], [], []>} : vector<8x8xbf16>, vector<8x8xbf16>, vector<8x8xf32> -> vector<8x8xf32>
    %93 = vector.broadcast %90 : vector<8x1xf32> to vector<8x8xf32>
    %94 = arith.mulf %92, %93 : vector<8x8xf32>
    %95 = arith.truncf %94 : vector<8x8xf32> to vector<8x8xbf16>
    %c0_38 = arith.constant 0 : index
    %c24_39 = arith.constant 24 : index
    %96 = vector.load %arg11[%c0_38, %c24_39] : memref<8x32xbf16, #tpu.memory_space<vmem>>, vector<8x8xbf16>
    tpu.vector_store %arg11[%c0_38, %c24_39], %95 {strides = array<i32>} : memref<8x32xbf16, #tpu.memory_space<vmem>>, vector<8x8xbf16>,
    %c0_40 = arith.constant 0 : index
    %c0_41 = arith.constant 0 : index
    %97 = vector.load %arg11[%c0_40, %c0_41] : memref<8x32xbf16, #tpu.memory_space<vmem>>, vector<8x32xbf16>
    %c0_42 = arith.constant 0 : index
    %c0_43 = arith.constant 0 : index
    %98 = vector.load %arg7[%c0_42, %c0_43] : memref<32x32xbf16, #tpu.memory_space<vmem>>, vector<32x32xbf16>
    %cst_44 = arith.constant dense<0.000000e+00> : vector<8x32xf32>
    %99 = tpu.matmul %97, %98, %cst_44 {dimension_numbers = #tpu.dot_dimension_numbers<[1], [0], [0], [1], [0, 0, 1, 1], [], []>} : vector<8x32xbf16>, vector<32x32xbf16>, vector<8x32xf32> -> vector<8x32xf32>
    %c0_45 = arith.constant 0 : index
    %c0_46 = arith.constant 0 : index
    %100 = vector.load %arg8[%c0_45, %c0_46] : memref<1x32xf32, #tpu.memory_space<vmem>>, vector<1x32xf32>
    %101 = vector.broadcast %100 : vector<1x32xf32> to vector<8x32xf32>
    %102 = arith.addf %99, %101 : vector<8x32xf32>
    %c0_47 = arith.constant 0 : index
    %c0_48 = arith.constant 0 : index
    %c0_49 = arith.constant 0 : index
    %103 = vector.load %arg9[%c0_47, %c0_48, %c0_49] : memref<1x8x32xf32, #tpu.memory_space<vmem>>, vector<1x8x32xf32>
    %104 = vector.shape_cast %103 : vector<1x8x32xf32> to vector<8x32xf32>
    %105 = vector.shape_cast %102 : vector<8x32xf32> to vector<1x8x32xf32>
    tpu.vector_store %arg9[%c0_47, %c0_48, %c0_49], %105 {strides = array<i32>} : memref<1x8x32xf32, #tpu.memory_space<vmem>>, vector<1x8x32xf32>,
    return
  }
  func.func @transform_0(%arg0: i32, %arg1: i32) -> (i32, i32, i32) {
    %c0_i32 = arith.constant 0 : i32
    %c0_i32_0 = arith.constant 0 : i32
    %c0_i32_1 = arith.constant 0 : i32
    return %arg0, %c0_i32, %c0_i32_0 : i32, i32, i32
  }
  func.func @transform_1(%arg0: i32, %arg1: i32) -> (i32, i32) {
    %c0_i32 = arith.constant 0 : i32
    %c0_i32_0 = arith.constant 0 : i32
    %c0_i32_1 = arith.constant 0 : i32
    return %c0_i32, %c0_i32_0 : i32, i32
  }
  func.func @transform_2(%arg0: i32, %arg1: i32) -> (i32, i32) {
    %c0_i32 = arith.constant 0 : i32
    %c0_i32_0 = arith.constant 0 : i32
    %c0_i32_1 = arith.constant 0 : i32
    return %c0_i32, %c0_i32_0 : i32, i32
  }
  func.func @transform_3(%arg0: i32, %arg1: i32) -> (i32, i32) {
    %c0_i32 = arith.constant 0 : i32
    %c0_i32_0 = arith.constant 0 : i32
    %c0_i32_1 = arith.constant 0 : i32
    return %c0_i32, %c0_i32_0 : i32, i32
  }
  func.func @transform_4(%arg0: i32, %arg1: i32) -> (i32, i32) {
    %c0_i32 = arith.constant 0 : i32
    %c0_i32_0 = arith.constant 0 : i32
    %c0_i32_1 = arith.constant 0 : i32
    return %c0_i32, %c0_i32_0 : i32, i32
  }
  func.func @transform_5(%arg0: i32, %arg1: i32) -> (i32, i32) {
    %c0_i32 = arith.constant 0 : i32
    %c0_i32_0 = arith.constant 0 : i32
    %c0_i32_1 = arith.constant 0 : i32
    return %c0_i32, %c0_i32_0 : i32, i32
  }
  func.func @transform_6(%arg0: i32, %arg1: i32) -> (i32, i32) {
    %c0_i32 = arith.constant 0 : i32
    %c0_i32_0 = arith.constant 0 : i32
    %c0_i32_1 = arith.constant 0 : i32
    return %c0_i32, %c0_i32_0 : i32, i32
  }
  func.func @transform_7(%arg0: i32, %arg1: i32) -> (i32, i32, i32) {
    %c0_i32 = arith.constant 0 : i32
    %c0_i32_0 = arith.constant 0 : i32
    return %arg0, %arg1, %c0_i32 : i32, i32, i32
  }
}

</mosaic_0001>

<llo_original>
// kernel: tpu_custom_call.1
$region0: #{tpu_custom_call.1}
  #allocation0 [shape = 'u32[]', space=smem, size = 0x4, offset = 0x4, fixed_abs, tag = 'smem constant byte address 0x4 - core index']
  #allocation1 [shape = 'u32[72,128]{1,0:T(1,128)}', space=vmem, size = 0x9000, scoped, tag = 'internal scratch']
  #allocation2 [shape = 'bf16[8,96]{1,0:T(8,128)(2,1)}', space=vmem, size = 0x800, scoped, tag = 'scratch operand']
  #allocation3 [shape = 'bf16[8,32]{1,0:T(8,128)(2,1)}', space=vmem, size = 0x800, scoped, tag = 'scratch operand']
  %s0 = inlined_call_operand.hbm [shape: f32[2,8,32], index: 0, kind: input, shape index: {}]
  %s1 = inlined_call_operand.hbm [shape: f32[1,32], index: 1, kind: input, shape index: {}]
  %s2 = inlined_call_operand.vmem [shape: f32[1,32], index: 2, kind: input, shape index: {}]
  %s3 = inlined_call_operand.hbm [shape: bf16[32,96], index: 3, kind: input, shape index: {}]
  %s4 = inlined_call_operand.vmem [shape: f32[1,96], index: 4, kind: input, shape index: {}]
  %s5 = inlined_call_operand.hbm [shape: bf16[32,32], index: 5, kind: input, shape index: {}]
  %s6 = inlined_call_operand.vmem [shape: f32[1,32], index: 6, kind: input, shape index: {}]
  %s7 = inlined_call_operand.hbm [shape: f32[2,8,32], index: 7, kind: output, shape index: {}]
  %s8 = sld [smem:[#allocation0]]
  $region81: #{tpu_custom_call.1} parent=0
    _
  %s10 = ssub.s32 1, %s8
  %s11 = scalar_select 0, %s10, %s8
  $region1: #{tpu_custom_call.1} parent=0
    #allocation4 [shape = 'u8[8192]{0}', space=vmem, size = 0x2000, scoped, tag = 'input window, operand 0']
    #allocation5 [shape = 's32[2]{0}', space=sflag, size = 0x8, scoped, tag = 'scoped memory for tpu_custom_call.1']
    #allocation6 [shape = 's32[2]{0}', space=sflag, size = 0x8, scoped, tag = 'scoped memory for tpu_custom_call.1']
    #allocation7 [shape = 'u8[512]{0}', space=vmem, size = 0x400, scoped, tag = 'input window, operand 1, single buffered']
    #allocation8 [shape = 's32[1]{0}', space=sflag, size = 0x4, scoped, tag = 'scoped memory for tpu_custom_call.1']
    #allocation9 [shape = 'u8[8192]{0}', space=vmem, size = 0x2000, scoped, tag = 'input window, operand 3, single buffered']
    #allocation10 [shape = 'u8[8192]{0}', space=vmem, size = 0x2000, scoped, tag = 'input window, operand 5, single buffered']
    #allocation11 [shape = 's32[1]{0}', space=sflag, size = 0x4, scoped, tag = 'scoped memory for tpu_custom_call.1']
    #allocation12 [shape = 'u8[8192]{0}', space=vmem, size = 0x2000, scoped, tag = 'output window, operand 0']
    %12 = vsyncpa [#allocation5], 0
    %s13 = scalar_lea.sflag [#allocation5], 1
    %14 = vsyncpa %s13, 0
    %15 = vsyncpa [#allocation8], 0
    %16 = vsyncpa [#allocation11], 0
    %17 = vsyncpa [#allocation6], 0
    %s18 = scalar_lea.sflag [#allocation6], 1
    %19 = vsyncpa %s18, 0
    loop: start=0, step=1, limit=4
    $region2: #{tpu_custom_call.1} parent=1 // loop_pre_header
      _
    $region3: #{tpu_custom_call.1} parent=1 // loop_header
      %s21 = sphi 0, %s25
      %p22 = scmp.ge.s32.totalorder %s21, 4
      %s28 = sphi 0, %s40
      %s29 = sphi 0, %s36
      %s30 = sphi 0, %s28
      %s31 = sphi 0, %s29
      %s32 = sphi 0, %s30
      %s33 = sphi 0, %s31
      %s43 = sphi 0, %s45
      %s46 = sphi 0, %s43
      %s47 = sphi 0, %s46
      %s63 = sphi 0, %s47
      %s67 = sphi 0, %s67
      %s69 = sphi 0, %s67
      %s70 = sphi 0, %s69
      %s84 = sphi 0, %s70
      %s88 = sphi 0, %s88
      %s90 = sphi 0, %s88
      %s91 = sphi 0, %s90
      %s105 = sphi 0, %s91
      %s109 = sphi 0, %s109
      %s111 = sphi 0, %s109
      %s112 = sphi 0, %s111
      %s126 = sphi 0, %s112
      %s130 = sphi 0, %s130
      %s132 = sphi 0, %s130
      %s133 = sphi 0, %s132
      %s147 = sphi 0, %s133
      %s151 = sphi 0, %s151
      %s153 = sphi 0, %s151
      %s154 = sphi 0, %s153
      %s168 = sphi 0, %s154
      %s172 = sphi 0, %s172
      %s174 = sphi 0, %s172
      %s175 = sphi 0, %s174
      %s189 = sphi 0, %s175
      %s197 = sphi 0, %s199
      %s200 = sphi 0, %s197
      %s201 = sphi 0, %s200
      %s217 = sphi 0, %s201
    $region4: #{tpu_custom_call.1} parent=1 // loop_header_branch
      %24 = sbr.rel (%p22) target = $region8
    $region5: #{tpu_custom_call.1} parent=1 // loop_body
      %s26 = ssub.s32 %s21, 1
      %s27 = ssub.s32 %s21, 2
      %s34 = sadd.s32 1, %s29
      %p35 = scmp.ge.s32.totalorder %s34, 1
      %s36 = scalar_select %p35, 0, %s34
      %s37 = sadd.s32 1, %s28
      %s38 = scalar_select %p35, %s37, %s28
      %p39 = scmp.ge.s32.totalorder %s38, 2
      %s40 = scalar_select %p39, 0, %s38
      %s41 = ssub.s32 %s28, %s40
      %p42 = scmp.eq.s32.totalorder %s41, 0
      %s44 = sadd.s32 %s43, 1
      %s45 = scalar_select %p42, %s43, %s44
      %p48 = pneg %p42
      %p49 = scmp.eq.s32.totalorder %s21, 1
      %p50 = por %p48, %p49
      %p51 = scmp.ne.s32.totalorder %s43, %s46
      %p52 = scmp.eq.s32.totalorder %s21, 0
      %p53 = por %p51, %p52
      %p54 = scmp.ne.s32.totalorder %s43, %s46
      %p55 = scmp.eq.s32.totalorder %s26, 1
      %p56 = por %p54, %p55
      %p57 = scmp.ne.s32.totalorder %s46, %s47
      %p58 = scmp.eq.s32.totalorder %s26, 0
      %p59 = por %p57, %p58
      %p60 = scmp.ne.s32.totalorder %s46, %s47
      %p61 = scmp.eq.s32.totalorder %s27, 1
      %p62 = por %p60, %p61
      %p64 = scmp.ne.s32.totalorder %s47, %s63
      %p65 = scmp.eq.s32.totalorder %s27, 0
      %p66 = por %p64, %p65
      %s68 = sadd.s32 %s67, 1
      %p71 = scmp.eq.s32.totalorder %s21, 1
      %p72 = scmp.ne.s32.totalorder %s67, %s69
      %p73 = scmp.eq.s32.totalorder %s21, 0
      %p74 = por %p72, %p73
      %p75 = scmp.ne.s32.totalorder %s67, %s69
      %p76 = scmp.eq.s32.totalorder %s26, 1
      %p77 = por %p75, %p76
      %p78 = scmp.ne.s32.totalorder %s69, %s70
      %p79 = scmp.eq.s32.totalorder %s26, 0
      %p80 = por %p78, %p79
      %p81 = scmp.ne.s32.totalorder %s69, %s70
      %p82 = scmp.eq.s32.totalorder %s27, 1
      %p83 = por %p81, %p82
      %p85 = scmp.ne.s32.totalorder %s70, %s84
      %p86 = scmp.eq.s32.totalorder %s27, 0
      %p87 = por %p85, %p86
      %s89 = sadd.s32 %s88, 1
      %p92 = scmp.eq.s32.totalorder %s21, 1
      %p93 = scmp.ne.s32.totalorder %s88, %s90
      %p94 = scmp.eq.s32.totalorder %s21, 0
      %p95 = por %p93, %p94
      %p96 = scmp.ne.s32.totalorder %s88, %s90
      %p97 = scmp.eq.s32.totalorder %s26, 1
      %p98 = por %p96, %p97
      %p99 = scmp.ne.s32.totalorder %s90, %s91
      %p100 = scmp.eq.s32.totalorder %s26, 0
      %p101 = por %p99, %p100
      %p102 = scmp.ne.s32.totalorder %s90, %s91
      %p103 = scmp.eq.s32.totalorder %s27, 1
      %p104 = por %p102, %p103
      %p106 = scmp.ne.s32.totalorder %s91, %s105
      %p107 = scmp.eq.s32.totalorder %s27, 0
      %p108 = por %p106, %p107
      %s110 = sadd.s32 %s109, 1
      %p113 = scmp.eq.s32.totalorder %s21, 1
      %p114 = scmp.ne.s32.totalorder %s109, %s111
      %p115 = scmp.eq.s32.totalorder %s21, 0
      %p116 = por %p114, %p115
      %p117 = scmp.ne.s32.totalorder %s109, %s111
      %p118 = scmp.eq.s32.totalorder %s26, 1
      %p119 = por %p117, %p118
      %p120 = scmp.ne.s32.totalorder %s111, %s112
      %p121 = scmp.eq.s32.totalorder %s26, 0
      %p122 = por %p120, %p121
      %p123 = scmp.ne.s32.totalorder %s111, %s112
      %p124 = scmp.eq.s32.totalorder %s27, 1
      %p125 = por %p123, %p124
      %p127 = scmp.ne.s32.totalorder %s112, %s126
      %p128 = scmp.eq.s32.totalorder %s27, 0
      %p129 = por %p127, %p128
      %s131 = sadd.s32 %s130, 1
      %p134 = scmp.eq.s32.totalorder %s21, 1
      %p135 = scmp.ne.s32.totalorder %s130, %s132
      %p136 = scmp.eq.s32.totalorder %s21, 0
      %p137 = por %p135, %p136
      %p138 = scmp.ne.s32.totalorder %s130, %s132
      %p139 = scmp.eq.s32.totalorder %s26, 1
      %p140 = por %p138, %p139
      %p141 = scmp.ne.s32.totalorder %s132, %s133
      %p142 = scmp.eq.s32.totalorder %s26, 0
      %p143 = por %p141, %p142
      %p144 = scmp.ne.s32.totalorder %s132, %s133
      %p145 = scmp.eq.s32.totalorder %s27, 1
      %p146 = por %p144, %p145
      %p148 = scmp.ne.s32.totalorder %s133, %s147
      %p149 = scmp.eq.s32.totalorder %s27, 0
      %p150 = por %p148, %p149
      %s152 = sadd.s32 %s151, 1
      %p155 = scmp.eq.s32.totalorder %s21, 1
      %p156 = scmp.ne.s32.totalorder %s151, %s153
      %p157 = scmp.eq.s32.totalorder %s21, 0
      %p158 = por %p156, %p157
      %p159 = scmp.ne.s32.totalorder %s151, %s153
      %p160 = scmp.eq.s32.totalorder %s26, 1
      %p161 = por %p159, %p160
      %p162 = scmp.ne.s32.totalorder %s153, %s154
      %p163 = scmp.eq.s32.totalorder %s26, 0
      %p164 = por %p162, %p163
      %p165 = scmp.ne.s32.totalorder %s153, %s154
      %p166 = scmp.eq.s32.totalorder %s27, 1
      %p167 = por %p165, %p166
      %p169 = scmp.ne.s32.totalorder %s154, %s168
      %p170 = scmp.eq.s32.totalorder %s27, 0
      %p171 = por %p169, %p170
      %s173 = sadd.s32 %s172, 1
      %p176 = scmp.eq.s32.totalorder %s21, 1
      %p177 = scmp.ne.s32.totalorder %s172, %s174
      %p178 = scmp.eq.s32.totalorder %s21, 0
      %p179 = por %p177, %p178
      %p180 = scmp.ne.s32.totalorder %s172, %s174
      %p181 = scmp.eq.s32.totalorder %s26, 1
      %p182 = por %p180, %p181
      %p183 = scmp.ne.s32.totalorder %s174, %s175
      %p184 = scmp.eq.s32.totalorder %s26, 0
      %p185 = por %p183, %p184
      %p186 = scmp.ne.s32.totalorder %s174, %s175
      %p187 = scmp.eq.s32.totalorder %s27, 1
      %p188 = por %p186, %p187
      %p190 = scmp.ne.s32.totalorder %s175, %s189
      %p191 = scmp.eq.s32.totalorder %s27, 0
      %p192 = por %p190, %p191
      %s193 = ssub.s32 %s28, %s40
      %s194 = ssub.s32 %s29, %s36
      %s195 = sor.u32 %s193, %s194
      %p196 = scmp.eq.s32.totalorder %s195, 0
      %s198 = sadd.s32 %s197, 1
      %s199 = scalar_select %p196, %s197, %s198
      %p202 = pneg %p196
      %p203 = scmp.eq.s32.totalorder %s21, 1
      %p204 = por %p202, %p203
      %p205 = scmp.ne.s32.totalorder %s197, %s200
      %p206 = scmp.eq.s32.totalorder %s21, 0
      %p207 = por %p205, %p206
      %p208 = scmp.ne.s32.totalorder %s197, %s200
      %p209 = scmp.eq.s32.totalorder %s26, 1
      %p210 = por %p208, %p209
      %p211 = scmp.ne.s32.totalorder %s200, %s201
      %p212 = scmp.eq.s32.totalorder %s26, 0
      %p213 = por %p211, %p212
      %p214 = scmp.ne.s32.totalorder %s200, %s201
      %p215 = scmp.eq.s32.totalorder %s27, 1
      %p216 = por %p214, %p215
      %p218 = scmp.ne.s32.totalorder %s201, %s217
      %p219 = scmp.eq.s32.totalorder %s27, 0
      %p220 = por %p218, %p219
      %p221 = scmp.le.s32.totalorder 1, %s21
      %p222 = scmp.lt.s32.totalorder %s21, 3
      %p223 = pnand %p221, %p222
      %p224 = pneg %p223
      // Predicated region
      $region9: #{tpu_custom_call.1} parent=5 // pred_check
        _
      $region10: #{tpu_custom_call.1} parent=5 // pred_check_branch
        %226 = sbr.rel (%p223) target = $region12
      $region11: #{tpu_custom_call.1} parent=5 // pred_region
        %s227 = ssub.s32 %s21, 1
        // Predicated region
        $region13: #{tpu_custom_call.1} parent=11 // pred_check
          %p228 = pneg %p80
        $region14: #{tpu_custom_call.1} parent=11 // pred_check_branch
          %230 = sbr.rel (%p228) target = $region16
        $region15: #{tpu_custom_call.1} parent=11 // pred_region
          %232 = vsyncadd [#allocation8], 0
          %s234 = sshll.u32 %s1, 4
          %s235 = int_to_ptr.hbm [resolvable:$true] %s234
          %s236 = sshll.u32 [#allocation7], 4
          %s237 = int_to_ptr.vmem [resolvable:$true] %s236
          %239 = dma.hbm_to_vmem [thread:$0]  %s235, 16, %s237, [#allocation8]
        $region16: #{tpu_custom_call.1} parent=11 // pred_fallthru
          _
        // Predicated region
        $region17: #{tpu_custom_call.1} parent=11 // pred_check
          %p240 = pneg %p101
        $region18: #{tpu_custom_call.1} parent=11 // pred_check_branch
          %242 = sbr.rel (%p240) target = $region20
        $region19: #{tpu_custom_call.1} parent=11 // pred_region
          _
        $region20: #{tpu_custom_call.1} parent=11 // pred_fallthru
          _
        // Predicated region
        $region21: #{tpu_custom_call.1} parent=11 // pred_check
          %p243 = pneg %p122
        $region22: #{tpu_custom_call.1} parent=11 // pred_check_branch
          %245 = sbr.rel (%p243) target = $region24
        $region23: #{tpu_custom_call.1} parent=11 // pred_region
          %247 = vsyncadd [#allocation8], 0
          %s248 = sshll.u32 %s3, 4
          %s249 = int_to_ptr.hbm [resolvable:$true] %s248
          %s250 = sshll.u32 [#allocation9], 4
          %s251 = int_to_ptr.vmem [resolvable:$true] %s250
          %256 = dma.hbm_to_vmem [thread:$0]  %s249, 256, %s251, [#allocation8], 64, 64, 4
        $region24: #{tpu_custom_call.1} parent=11 // pred_fallthru
          _
        // Predicated region
        $region25: #{tpu_custom_call.1} parent=11 // pred_check
          %p257 = pneg %p143
        $region26: #{tpu_custom_call.1} parent=11 // pred_check_branch
          %259 = sbr.rel (%p257) target = $region28
        $region27: #{tpu_custom_call.1} parent=11 // pred_region
          _
        $region28: #{tpu_custom_call.1} parent=11 // pred_fallthru
          _
        // Predicated region
        $region29: #{tpu_custom_call.1} parent=11 // pred_check
          %p260 = pneg %p164
        $region30: #{tpu_custom_call.1} parent=11 // pred_check_branch
          %262 = sbr.rel (%p260) target = $region32
        $region31: #{tpu_custom_call.1} parent=11 // pred_region
          %264 = vsyncadd [#allocation11], 0
          %s265 = sshll.u32 %s5, 4
          %s266 = int_to_ptr.hbm [resolvable:$true] %s265
          %s267 = sshll.u32 [#allocation10], 4
          %s268 = int_to_ptr.vmem [resolvable:$true] %s267
          %273 = dma.hbm_to_vmem [thread:$0]  %s266, 256, %s268, [#allocation11], 64, 64, 4
        $region32: #{tpu_custom_call.1} parent=11 // pred_fallthru
          _
        // Predicated region
        $region33: #{tpu_custom_call.1} parent=11 // pred_check
          %p274 = pneg %p185
        $region34: #{tpu_custom_call.1} parent=11 // pred_check_branch
          %276 = sbr.rel (%p274) target = $region36
        $region35: #{tpu_custom_call.1} parent=11 // pred_region
          _
        $region36: #{tpu_custom_call.1} parent=11 // pred_fallthru
          _
      $region12: #{tpu_custom_call.1} parent=5 // pred_fallthru
        _
      %p277 = scmp.lt.s32.totalorder %s21, 2
      // Predicated region
      $region37: #{tpu_custom_call.1} parent=5 // pred_check
        %p278 = pneg %p277
      $region38: #{tpu_custom_call.1} parent=5 // pred_check_branch
        %280 = sbr.rel (%p278) target = $region40
      $region39: #{tpu_custom_call.1} parent=5 // pred_region
        // Predicated region
        $region41: #{tpu_custom_call.1} parent=39 // pred_check
          %p281 = pneg %p53
        $region42: #{tpu_custom_call.1} parent=39 // pred_check_branch
          %283 = sbr.rel (%p281) target = $region44
        $region43: #{tpu_custom_call.1} parent=39 // pred_region
          %s284 = sand.u32 %s43, 1
          %s285 = scalar_lea.sflag [#allocation5], %s284
          %s286 = sand.u32 %s43, 1
          %s287 = smul.addr %s286, 8
          %s288 = scalar_lea.vmem [#allocation4], %s287
          %290 = vsyncadd %s285, 0
          %s291 = smul.addr %s28, 8
          %s292 = scalar_lea.hbm %s0, %s291
          %s294 = sshll.u32 %s292, 4
          %s295 = int_to_ptr.hbm [resolvable:$true] %s294
          %s296 = sshll.u32 %s288, 4
          %s297 = int_to_ptr.vmem [resolvable:$true] %s296
          %299 = dma.hbm_to_vmem [thread:$0]  %s295, 128, %s297, %s285
        $region44: #{tpu_custom_call.1} parent=39 // pred_fallthru
          _
      $region40: #{tpu_custom_call.1} parent=5 // pred_fallthru
        _
      %p300 = scmp.le.s32.totalorder 1, %s21
      %p301 = scmp.lt.s32.totalorder %s21, 3
      %p302 = pnand %p300, %p301
      %p303 = pneg %p302
      // Predicated region
      $region45: #{tpu_custom_call.1} parent=5 // pred_check
        _
      $region46: #{tpu_custom_call.1} parent=5 // pred_check_branch
        %305 = sbr.rel (%p302) target = $region48
      $region47: #{tpu_custom_call.1} parent=5 // pred_region
        %s306 = ssub.s32 %s21, 1
        %s307 = sand.u32 %s46, 1
        %s308 = scalar_lea.sflag [#allocation5], %s307
        %s309 = sand.u32 %s46, 1
        %s310 = smul.addr %s309, 8
        %s311 = scalar_lea.vmem [#allocation4], %s310
        // Predicated region
        $region49: #{tpu_custom_call.1} parent=47 // pred_check
          %p312 = pneg %p59
        $region50: #{tpu_custom_call.1} parent=47 // pred_check_branch
          %314 = sbr.rel (%p312) target = $region52
        $region51: #{tpu_custom_call.1} parent=47 // pred_region
          %316 = dma.done %s308, 128
        $region52: #{tpu_custom_call.1} parent=47 // pred_fallthru
          _
        // Predicated region
        $region53: #{tpu_custom_call.1} parent=47 // pred_check
          %p317 = pneg %p80
        $region54: #{tpu_custom_call.1} parent=47 // pred_check_branch
          %319 = sbr.rel (%p317) target = $region56
        $region55: #{tpu_custom_call.1} parent=47 // pred_region
          %321 = dma.done [#allocation8], 16
        $region56: #{tpu_custom_call.1} parent=47 // pred_fallthru
          _
        // Predicated region
        $region57: #{tpu_custom_call.1} parent=47 // pred_check
          %p322 = pneg %p122
        $region58: #{tpu_custom_call.1} parent=47 // pred_check_branch
          %324 = sbr.rel (%p322) target = $region60
        $region59: #{tpu_custom_call.1} parent=47 // pred_region
          %326 = dma.done [#allocation8], 256
        $region60: #{tpu_custom_call.1} parent=47 // pred_fallthru
          _
        // Predicated region
        $region61: #{tpu_custom_call.1} parent=47 // pred_check
          %p327 = pneg %p164
        $region62: #{tpu_custom_call.1} parent=47 // pred_check_branch
          %329 = sbr.rel (%p327) target = $region64
        $region63: #{tpu_custom_call.1} parent=47 // pred_region
          %331 = dma.done [#allocation11], 256
        $region64: #{tpu_custom_call.1} parent=47 // pred_fallthru
          _
        %s332 = sand.u32 %s46, 1
        %s333 = scalar_lea.sflag [#allocation5], %s332
        %s334 = sand.u32 %s46, 1
        %s335 = smul.addr %s334, 8
        %s336 = scalar_lea.vmem [#allocation4], %s335
        %p337 = pneg %p59
        %p338 = pneg %p56
        %p339 = pneg %p80
        %p340 = pneg %p77
        %p341 = pneg %p101
        %p342 = pneg %p98
        %p343 = pneg %p122
        %p344 = pneg %p119
        %p345 = pneg %p143
        %p346 = pneg %p140
        %p347 = pneg %p164
        %p348 = pneg %p161
        %p349 = pneg %p185
        %p350 = pneg %p182
        %p351 = pneg %p213
        %p352 = pneg %p210
        %s353 = sand.u32 %s200, 1
        %s354 = scalar_lea.sflag [#allocation6], %s353
        %s355 = sand.u32 %s200, 1
        %s356 = smul.addr %s355, 8
        %s357 = scalar_lea.vmem [#allocation12], %s356
        %p359 = scmp.eq.s32.totalorder %s31, 0
        // Predicated region
        $region65: #{tpu_custom_call.1} parent=47 // pred_check
          %p360 = pneg %p359
        $region66: #{tpu_custom_call.1} parent=47 // pred_check_branch
          %362 = sbr.rel (%p360) target = $region68
        $region67: #{tpu_custom_call.1} parent=47 // pred_region
          %v363 = vld [vmem:[%s311] sm:$0xff]
          %vm364 = vcmask 261120
          %v365 = vsel %vm364, %v363, 0.0
          %366 = vadd.xlane.f32.xlu0 %v365
          %v367 = vpop.xlane.xlu0 %366
          %v368 = vrcp.pop 32.0
          %v369 = vmul.f32 32.0, %v368
          %v370 = vsub.f32 1.0, %v369
          %v371 = vmul.f32 %v368, %v370
          %v372 = vadd.f32 %v368, %v371
          %vm373 = vweird.f32 %v368
          %v374 = vsel %vm373, %v368, %v372
          %v375 = vmul.f32 %v367, %v374
          %v376 = vsub.f32 %v363, %v375
          %v377 = vmul.f32 %v376, %v376
          %v378 = vsel %vm364, %v377, 0.0
          %379 = vadd.xlane.f32.xlu0 %v378
          %v380 = vpop.xlane.xlu0 %379
          %v381 = vmul.f32 %v380, %v374
          %v382 = vadd.f32 %v381, 1e-06
          %v383 = vrsqrt.pop %v382
          %v384 = vmul.f32 %v383, %v382
          %v385 = vmul.f32 %v384, %v383
          %v386 = vmul.f32 0.5, %v385
          %v387 = vsub.f32 1.5, %v386
          %v388 = vmul.f32 %v383, %v387
          %vm389 = vweird.f32 %v382
          %vm390 = vweird.f32 %v383
          %vm391 = vmor %vm389, %vm390
          %v392 = vsel %vm391, %v383, %v388
          %v393 = vmul.f32 %v376, %v392
          %v394 = vld [vmem:[#allocation7] sm:$0x1]
          %v396 = vperm.slane %v394, 0
          %v398 = vmul.f32 %v393, %v396
          %v399 = vld [vmem:[%s2] sm:$0x1]
          %v401 = vperm.slane %v399, 0
          %v403 = vadd.f32 %v398, %v401
          %v404 = vpack.c.bf16 %v403, %v403
          %v405 = vld [vmem:[#allocation9] sm:$0xf]
          %v406 = vld [vmem:[#allocation9 + $0x4] sm:$0xf]
          %v407 = vld [vmem:[#allocation9 + $0x8] sm:$0xf]
          %v408 = vld [vmem:[#allocation9 + $0xc] sm:$0xf]
          %v409 = vld [vmem:[%s4] sm:$0x1]
          %v411 = vperm.slane %v409, 0
          %v417 = vunpack.c.l.b16 %v405
          %v418 = vunpack.c.l.b16 %v406
          %v419 = vunpack.c.l.b16 %v407
          %v420 = vunpack.c.l.b16 %v408
          %v421 = vpack.c.b16 %v418, %v417
          %v422 = vpack.c.b16 %v420, %v419
          %v426 = vsel %vm364, %v404, 0
          %428 = vmatpush.bf16.msra.mxu0 0
          %429 = vmatpush.bf16.msra.mxu0 0
          %430 = vmatpush.bf16.msra.mxu0 0
          %431 = vmatpush.bf16.msra.mxu0 0
          %432 = vmatpush.bf16.msra.mxu0 0
          %433 = vmatpush.bf16.msra.mxu0 0
          %434 = vmatpush.bf16.msra.mxu0 %v422
          %435 = vmatpush.bf16.msra.mxu0 %v421
          %436 = vmatmul.bf16.gmra.mxu0 %v426
          %v437 = vpop.f32.mrf.mxu0
          %v438 = vadd.f32 %v411, %v437
          %v439 = vpop.f32.mrf.mxu0
          %440 = vdwg.mxu0
          %v441 = vpack.c.bf16 %v438, %v438
          %vm442 = vcmask 781312
          %443 = vst.msk [vmem:[#allocation2] sm:$0xf] %vm442, %v441
        $region68: #{tpu_custom_call.1} parent=47 // pred_fallthru
          _
        %s444 = smul.u32 %s31, 8
        %s445 = sshra.s32 %s444, 3
        %s446 = sand.u32 %s444, 7
        %s447 = smul.addr %s445, 4
        %s448 = scalar_lea.vmem [#allocation2], %s447
        %v449 = vld [vmem:[%s448] sm:$0xf]
        %v450 = vld [vmem:[#allocation2] sm:$0xf]
        %v452 = vunpack.c.l.b16 %v450
        %v453 = vpack.c.b16 %v452, %v452
        %454 = vrot.lane.b32.xlu0 %v453, 96
        %v455 = vpop.permute.xlu0 %454
        %vm456 = vcmask 64512
        %v458 = vsel %vm456, %v449, 0
        %v461 = vsel %vm456, %v455, 0
        %463 = vmatpush.bf16.xpose.msra.mxu0 0
        %464 = vmatpush.bf16.xpose.msra.mxu0 0
        %465 = vmatpush.bf16.xpose.msra.mxu0 0
        %466 = vmatpush.bf16.xpose.msra.mxu0 0
        %467 = vmatpush.bf16.xpose.msra.mxu0 0
        %468 = vmatpush.bf16.xpose.msra.mxu0 0
        %469 = vmatpush.bf16.xpose.msra.mxu0 0
        %470 = vmatpush.bf16.xpose.msra.mxu0 %v461
        %471 = vmatmul.bf16.gmra.mxu0 %v458
        %v472 = vpop.f32.mrf.mxu0
        %v473 = vadd.f32 0.0, %v472
        %v474 = vpop.f32.mrf.mxu0
        %475 = vdwg.mxu0
        %v476 = vmax.f32 %v473, -10000.0
        %v477 = vmin.f32 %v476, 10000.0
        %v478 = vsel %vm456, %v477, -inf
        %479 = vmax.xlane.f32.xlu0 %v478
        %v480 = vpop.xlane.xlu0 %479
        %v481 = vsub.f32 %v477, %v480
        %v482 = vmul.f32 %v481, 1.442695
        %v483 = vpow.pop %v482
        %v484 = vsel %vm456, %v483, 0.0
        %485 = vadd.xlane.f32.xlu0 %v484
        %v486 = vpop.xlane.xlu0 %485
        %v487 = vrcp.pop %v486
        %v488 = vpack.c.bf16 %v483, %v483
        %489 = vrot.lane.b32.xlu0 %v453, 64
        %v490 = vpop.permute.xlu0 %489
        %v492 = vsel %vm456, %v488, 0
        %vm494 = vcmask 1043456
        %v496 = vsel %vm494, %v490, 0
        %498 = vmatpush.bf16.msra.mxu0 0
        %499 = vmatpush.bf16.msra.mxu0 0
        %500 = vmatpush.bf16.msra.mxu0 0
        %501 = vmatpush.bf16.msra.mxu0 0
        %502 = vmatpush.bf16.msra.mxu0 0
        %503 = vmatpush.bf16.msra.mxu0 0
        %504 = vmatpush.bf16.msra.mxu0 0
        %505 = vmatpush.bf16.msra.mxu0 %v496
        %506 = vmatmul.bf16.gmra.mxu0 %v492
        %v507 = vpop.f32.mrf.mxu0
        %v508 = vadd.f32 0.0, %v507
        %v509 = vpop.f32.mrf.mxu0
        %510 = vdwg.mxu0
        %v511 = vmul.f32 %v508, %v487
        %v512 = vpack.c.bf16 %v511, %v511
        %vm513 = vcmask 60416
        %514 = vst.msk [vmem:[#allocation3] sm:$0xf] %vm513, %v512
        %v515 = vld [vmem:[%s448] sm:$0xf]
        %v516 = vld [vmem:[#allocation2] sm:$0xf]
        %v518 = vunpack.c.l.b16 %v515
        %v519 = vpack.c.b16 %v518, %v518
        %520 = vrot.lane.b32.xlu0 %v519, 120
        %v521 = vpop.permute.xlu0 %520
        %v523 = vunpack.c.l.b16 %v516
        %v524 = vpack.c.b16 %v523, %v523
        %525 = vrot.lane.b32.xlu0 %v524, 88
        %v526 = vpop.permute.xlu0 %525
        %v528 = vsel %vm456, %v521, 0
        %v531 = vsel %vm456, %v526, 0
        %533 = vmatpush.bf16.xpose.msra.mxu0 0
        %534 = vmatpush.bf16.xpose.msra.mxu0 0
        %535 = vmatpush.bf16.xpose.msra.mxu0 0
        %536 = vmatpush.bf16.xpose.msra.mxu0 0
        %537 = vmatpush.bf16.xpose.msra.mxu0 0
        %538 = vmatpush.bf16.xpose.msra.mxu0 0
        %539 = vmatpush.bf16.xpose.msra.mxu0 0
        %540 = vmatpush.bf16.xpose.msra.mxu0 %v531
        %541 = vmatmul.bf16.gmra.mxu0 %v528
        %v542 = vpop.f32.mrf.mxu0
        %v543 = vadd.f32 0.0, %v542
        %v544 = vpop.f32.mrf.mxu0
        %545 = vdwg.mxu0
        %v546 = vmax.f32 %v543, -10000.0
        %v547 = vmin.f32 %v546, 10000.0
        %v548 = vsel %vm456, %v547, -inf
        %549 = vmax.xlane.f32.xlu0 %v548
        %v550 = vpop.xlane.xlu0 %549
        %v551 = vsub.f32 %v547, %v550
        %v552 = vmul.f32 %v551, 1.442695
        %v553 = vpow.pop %v552
        %v554 = vsel %vm456, %v553, 0.0
        %555 = vadd.xlane.f32.xlu0 %v554
        %v556 = vpop.xlane.xlu0 %555
        %v557 = vrcp.pop %v556
        %v558 = vpack.c.bf16 %v553, %v553
        %559 = vrot.lane.b32.xlu0 %v524, 56
        %v560 = vpop.permute.xlu0 %559
        %v562 = vsel %vm456, %v558, 0
        %v565 = vsel %vm494, %v560, 0
        %567 = vmatpush.bf16.msra.mxu0 0
        %568 = vmatpush.bf16.msra.mxu0 0
        %569 = vmatpush.bf16.msra.mxu0 0
        %570 = vmatpush.bf16.msra.mxu0 0
        %571 = vmatpush.bf16.msra.mxu0 0
        %572 = vmatpush.bf16.msra.mxu0 0
        %573 = vmatpush.bf16.msra.mxu0 0
        %574 = vmatpush.bf16.msra.mxu0 %v565
        %575 = vmatmul.bf16.gmra.mxu0 %v562
        %v576 = vpop.f32.mrf.mxu0
        %v577 = vadd.f32 0.0, %v576
        %v578 = vpop.f32.mrf.mxu0
        %579 = vdwg.mxu0
        %v580 = vmul.f32 %v577, %v557
        %v581 = vpack.c.bf16 %v580, %v580
        %583 = vrot.lane.b32.xlu0 %v581, 8
        %v584 = vpop.permute.xlu0 %583
        %vm586 = vcmask 126016
        %587 = vst.msk [vmem:[#allocation3] sm:$0xf] %vm586, %v584
        %v588 = vld [vmem:[%s448] sm:$0xf]
        %v589 = vld [vmem:[#allocation2] sm:$0xf]
        %v591 = vunpack.c.l.b16 %v588
        %v592 = vpack.c.b16 %v591, %v591
        %593 = vrot.lane.b32.xlu0 %v592, 112
        %v594 = vpop.permute.xlu0 %593
        %v596 = vunpack.c.l.b16 %v589
        %v597 = vpack.c.b16 %v596, %v596
        %598 = vrot.lane.b32.xlu0 %v597, 80
        %v599 = vpop.permute.xlu0 %598
        %v601 = vsel %vm456, %v594, 0
        %v604 = vsel %vm456, %v599, 0
        %606 = vmatpush.bf16.xpose.msra.mxu0 0
        %607 = vmatpush.bf16.xpose.msra.mxu0 0
        %608 = vmatpush.bf16.xpose.msra.mxu0 0
        %609 = vmatpush.bf16.xpose.msra.mxu0 0
        %610 = vmatpush.bf16.xpose.msra.mxu0 0
        %611 = vmatpush.bf16.xpose.msra.mxu0 0
        %612 = vmatpush.bf16.xpose.msra.mxu0 0
        %613 = vmatpush.bf16.xpose.msra.mxu0 %v604
        %614 = vmatmul.bf16.gmra.mxu0 %v601
        %v615 = vpop.f32.mrf.mxu0
        %v616 = vadd.f32 0.0, %v615
        %v617 = vpop.f32.mrf.mxu0
        %618 = vdwg.mxu0
        %v619 = vmax.f32 %v616, -10000.0
        %v620 = vmin.f32 %v619, 10000.0
        %v621 = vsel %vm456, %v620, -inf
        %622 = vmax.xlane.f32.xlu0 %v621
        %v623 = vpop.xlane.xlu0 %622
        %v624 = vsub.f32 %v620, %v623
        %v625 = vmul.f32 %v624, 1.442695
        %v626 = vpow.pop %v625
        %v627 = vsel %vm456, %v626, 0.0
        %628 = vadd.xlane.f32.xlu0 %v627
        %v629 = vpop.xlane.xlu0 %628
        %v630 = vrcp.pop %v629
        %v631 = vpack.c.bf16 %v626, %v626
        %632 = vrot.lane.b32.xlu0 %v597, 48
        %v633 = vpop.permute.xlu0 %632
        %v635 = vsel %vm456, %v631, 0
        %v638 = vsel %vm494, %v633, 0
        %640 = vmatpush.bf16.msra.mxu0 0
        %641 = vmatpush.bf16.msra.mxu0 0
        %642 = vmatpush.bf16.msra.mxu0 0
        %643 = vmatpush.bf16.msra.mxu0 0
        %644 = vmatpush.bf16.msra.mxu0 0
        %645 = vmatpush.bf16.msra.mxu0 0
        %646 = vmatpush.bf16.msra.mxu0 0
        %647 = vmatpush.bf16.msra.mxu0 %v638
        %648 = vmatmul.bf16.gmra.mxu0 %v635
        %v649 = vpop.f32.mrf.mxu0
        %v650 = vadd.f32 0.0, %v649
        %v651 = vpop.f32.mrf.mxu0
        %652 = vdwg.mxu0
        %v653 = vmul.f32 %v650, %v630
        %v654 = vpack.c.bf16 %v653, %v653
        %656 = vrot.lane.b32.xlu0 %v654, 16
        %v657 = vpop.permute.xlu0 %656
        %vm659 = vcmask 191616
        %660 = vst.msk [vmem:[#allocation3] sm:$0xf] %vm659, %v657
        %v661 = vld [vmem:[%s448] sm:$0xf]
        %v662 = vld [vmem:[#allocation2] sm:$0xf]
        %v664 = vunpack.c.l.b16 %v661
        %v665 = vpack.c.b16 %v664, %v664
        %666 = vrot.lane.b32.xlu0 %v665, 104
        %v667 = vpop.permute.xlu0 %666
        %v669 = vunpack.c.l.b16 %v662
        %v670 = vpack.c.b16 %v669, %v669
        %671 = vrot.lane.b32.xlu0 %v670, 72
        %v672 = vpop.permute.xlu0 %671
        %v674 = vsel %vm456, %v667, 0
        %v677 = vsel %vm456, %v672, 0
        %679 = vmatpush.bf16.xpose.msra.mxu0 0
        %680 = vmatpush.bf16.xpose.msra.mxu0 0
        %681 = vmatpush.bf16.xpose.msra.mxu0 0
        %682 = vmatpush.bf16.xpose.msra.mxu0 0
        %683 = vmatpush.bf16.xpose.msra.mxu0 0
        %684 = vmatpush.bf16.xpose.msra.mxu0 0
        %685 = vmatpush.bf16.xpose.msra.mxu0 0
        %686 = vmatpush.bf16.xpose.msra.mxu0 %v677
        %687 = vmatmul.bf16.gmra.mxu0 %v674
        %v688 = vpop.f32.mrf.mxu0
        %v689 = vadd.f32 0.0, %v688
        %v690 = vpop.f32.mrf.mxu0
        %691 = vdwg.mxu0
        %v692 = vmax.f32 %v689, -10000.0
        %v693 = vmin.f32 %v692, 10000.0
        %v694 = vsel %vm456, %v693, -inf
        %695 = vmax.xlane.f32.xlu0 %v694
        %v696 = vpop.xlane.xlu0 %695
        %v697 = vsub.f32 %v693, %v696
        %v698 = vmul.f32 %v697, 1.442695
        %v699 = vpow.pop %v698
        %v700 = vsel %vm456, %v699, 0.0
        %701 = vadd.xlane.f32.xlu0 %v700
        %v702 = vpop.xlane.xlu0 %701
        %v703 = vrcp.pop %v702
        %v704 = vpack.c.bf16 %v699, %v699
        %705 = vrot.lane.b32.xlu0 %v670, 40
        %v706 = vpop.permute.xlu0 %705
        %v708 = vsel %vm456, %v704, 0
        %v711 = vsel %vm494, %v706, 0
        %713 = vmatpush.bf16.msra.mxu0 0
        %714 = vmatpush.bf16.msra.mxu0 0
        %715 = vmatpush.bf16.msra.mxu0 0
        %716 = vmatpush.bf16.msra.mxu0 0
        %717 = vmatpush.bf16.msra.mxu0 0
        %718 = vmatpush.bf16.msra.mxu0 0
        %719 = vmatpush.bf16.msra.mxu0 0
        %720 = vmatpush.bf16.msra.mxu0 %v711
        %721 = vmatmul.bf16.gmra.mxu0 %v708
        %v722 = vpop.f32.mrf.mxu0
        %v723 = vadd.f32 0.0, %v722
        %v724 = vpop.f32.mrf.mxu0
        %725 = vdwg.mxu0
        %v726 = vmul.f32 %v723, %v703
        %v727 = vpack.c.bf16 %v726, %v726
        %729 = vrot.lane.b32.xlu0 %v727, 24
        %v730 = vpop.permute.xlu0 %729
        %vm732 = vcmask 257216
        %733 = vst.msk [vmem:[#allocation3] sm:$0xf] %vm732, %v730
        %v734 = vld [vmem:[#allocation3] sm:$0xf]
        %v735 = vld [vmem:[#allocation10] sm:$0xf]
        %v736 = vld [vmem:[#allocation10 + $0x4] sm:$0xf]
        %v737 = vld [vmem:[#allocation10 + $0x8] sm:$0xf]
        %v738 = vld [vmem:[#allocation10 + $0xc] sm:$0xf]
        %v739 = vld [vmem:[%s6] sm:$0x1]
        %v741 = vperm.slane %v739, 0
        %v747 = vunpack.c.l.b16 %v735
        %v748 = vunpack.c.l.b16 %v736
        %v749 = vunpack.c.l.b16 %v737
        %v750 = vunpack.c.l.b16 %v738
        %v751 = vpack.c.b16 %v748, %v747
        %v752 = vpack.c.b16 %v750, %v749
        %vm755 = vcmask 261120
        %v757 = vsel %vm755, %v734, 0
        %759 = vmatpush.bf16.msra.mxu0 0
        %760 = vmatpush.bf16.msra.mxu0 0
        %761 = vmatpush.bf16.msra.mxu0 0
        %762 = vmatpush.bf16.msra.mxu0 0
        %763 = vmatpush.bf16.msra.mxu0 0
        %764 = vmatpush.bf16.msra.mxu0 0
        %765 = vmatpush.bf16.msra.mxu0 %v752
        %766 = vmatpush.bf16.msra.mxu0 %v751
        %767 = vmatmul.bf16.gmra.mxu0 %v757
        %v768 = vpop.f32.mrf.mxu0
        %v769 = vadd.f32 %v741, %v768
        %v770 = vpop.f32.mrf.mxu0
        %771 = vdwg.mxu0
        %772 = vst.msk [vmem:[%s357] sm:$0xff] %vm755, %v769
        %s773 = sand.u32 %s200, 1
        %s774 = scalar_lea.sflag [#allocation6], %s773
        %s775 = sand.u32 %s200, 1
        %s776 = smul.addr %s775, 8
        %s777 = scalar_lea.vmem [#allocation12], %s776
        // Predicated region
        $region69: #{tpu_custom_call.1} parent=47 // pred_check
          %p778 = pneg %p210
        $region70: #{tpu_custom_call.1} parent=47 // pred_check_branch
          %780 = sbr.rel (%p778) target = $region72
        $region71: #{tpu_custom_call.1} parent=47 // pred_region
          %782 = vsyncadd %s774, 0
          %s783 = sadd.s32 %s31, %s30
          %s784 = smul.addr %s783, 8
          %s785 = scalar_lea.hbm %s7, %s784
          %s787 = sshll.u32 %s777, 4
          %s788 = int_to_ptr.vmem [resolvable:$true] %s787
          %s789 = sshll.u32 %s785, 4
          %s790 = int_to_ptr.hbm [resolvable:$true] %s789
          %792 = dma.vmem_to_hbm [thread:$0]  %s788, 128, %s790, %s774
        $region72: #{tpu_custom_call.1} parent=47 // pred_fallthru
          _
      $region48: #{tpu_custom_call.1} parent=5 // pred_fallthru
        _
      %p793 = scmp.le.s32.totalorder 2, %s21
      // Predicated region
      $region73: #{tpu_custom_call.1} parent=5 // pred_check
        %p794 = pneg %p793
      $region74: #{tpu_custom_call.1} parent=5 // pred_check_branch
        %796 = sbr.rel (%p794) target = $region76
      $region75: #{tpu_custom_call.1} parent=5 // pred_region
        %s797 = ssub.s32 %s21, 2
        // Predicated region
        $region77: #{tpu_custom_call.1} parent=75 // pred_check
          %p798 = pneg %p216
        $region78: #{tpu_custom_call.1} parent=75 // pred_check_branch
          %800 = sbr.rel (%p798) target = $region80
        $region79: #{tpu_custom_call.1} parent=75 // pred_region
          %s801 = sand.u32 %s201, 1
          %s802 = scalar_lea.sflag [#allocation6], %s801
          %s803 = sand.u32 %s201, 1
          %s804 = smul.addr %s803, 8
          %s805 = scalar_lea.vmem [#allocation12], %s804
          %807 = dma.done %s802, 128
        $region80: #{tpu_custom_call.1} parent=75 // pred_fallthru
          _
      $region76: #{tpu_custom_call.1} parent=5 // pred_fallthru
        _
    $region6: #{tpu_custom_call.1} parent=1 // loop_footer
      %s25 = sadd.s32 1, %s21
    $region7: #{tpu_custom_call.1} parent=1 // loop_footer_branch
      %20 = sbr.rel target = $region3
    $region8: #{tpu_custom_call.1} parent=1 // loop_exit
      _
    %808 = vsyncpa [#allocation5], 1
    %s809 = scalar_lea.sflag [#allocation5], 1
    %810 = vsyncpa %s809, 1
    %811 = vsyncpa [#allocation8], 1
    %812 = vsyncpa [#allocation11], 1
    %813 = vsyncpa [#allocation6], 1
    %s814 = scalar_lea.sflag [#allocation6], 1
    %815 = vsyncpa %s814, 1

// kernel: tpu_custom_call.1
$region0: #{tpu_custom_call.1}
  #allocation0 [shape = 'u32[]', space=smem, size = 0x4, offset = 0x4, fixed_abs, tag = 'smem constant byte address 0x4 - core index']
  #allocation1 [shape = 'u32[72,128]{1,0:T(1,128)}', space=vmem, size = 0x9000, scoped, tag = 'internal scratch']
  #allocation2 [shape = 'bf16[8,96]{1,0:T(8,128)(2,1)}', space=vmem, size = 0x800, scoped, tag = 'scratch operand']
  #allocation3 [shape = 'bf16[8,32]{1,0:T(8,128)(2,1)}', space=vmem, size = 0x800, scoped, tag = 'scratch operand']
  %s0 = inlined_call_operand.hbm [shape: f32[2,8,32], index: 0, kind: input, shape index: {}]
  %s1 = inlined_call_operand.hbm [shape: f32[1,32], index: 1, kind: input, shape index: {}]
  %s2 = inlined_call_operand.vmem [shape: f32[1,32], index: 2, kind: input, shape index: {}]
  %s3 = inlined_call_operand.hbm [shape: bf16[32,96], index: 3, kind: input, shape index: {}]
  %s4 = inlined_call_operand.vmem [shape: f32[1,96], index: 4, kind: input, shape index: {}]
  %s5 = inlined_call_operand.hbm [shape: bf16[32,32], index: 5, kind: input, shape index: {}]
  %s6 = inlined_call_operand.vmem [shape: f32[1,32], index: 6, kind: input, shape index: {}]
  %s7 = inlined_call_operand.hbm [shape: f32[2,8,32], index: 7, kind: output, shape index: {}]
  %s8 = sld [smem:[#allocation0]]
  $region81: #{tpu_custom_call.1} parent=0
    _
  %s10 = ssub.s32 1, %s8
  %s11 = scalar_select 0, %s10, %s8
  $region1: #{tpu_custom_call.1} parent=0
    #allocation4 [shape = 'u8[8192]{0}', space=vmem, size = 0x2000, scoped, tag = 'input window, operand 0']
    #allocation5 [shape = 's32[2]{0}', space=sflag, size = 0x8, scoped, tag = 'scoped memory for tpu_custom_call.1']
    #allocation6 [shape = 's32[2]{0}', space=sflag, size = 0x8, scoped, tag = 'scoped memory for tpu_custom_call.1']
    #allocation7 [shape = 'u8[512]{0}', space=vmem, size = 0x400, scoped, tag = 'input window, operand 1, single buffered']
    #allocation8 [shape = 's32[1]{0}', space=sflag, size = 0x4, scoped, tag = 'scoped memory for tpu_custom_call.1']
    #allocation9 [shape = 'u8[8192]{0}', space=vmem, size = 0x2000, scoped, tag = 'input window, operand 3, single buffered']
    #allocation10 [shape = 'u8[8192]{0}', space=vmem, size = 0x2000, scoped, tag = 'input window, operand 5, single buffered']
    #allocation11 [shape = 's32[1]{0}', space=sflag, size = 0x4, scoped, tag = 'scoped memory for tpu_custom_call.1']
    #allocation12 [shape = 'u8[8192]{0}', space=vmem, size = 0x2000, scoped, tag = 'output window, operand 0']
    %12 = vsyncpa [#allocation5], 0
    %s13 = scalar_lea.sflag [#allocation5], 1
    %14 = vsyncpa %s13, 0
    %15 = vsyncpa [#allocation8], 0
    %16 = vsyncpa [#allocation11], 0
    %17 = vsyncpa [#allocation6], 0
    %s18 = scalar_lea.sflag [#allocation6], 1
    %19 = vsyncpa %s18, 0
    loop: start=0, step=1, limit=4
    $region2: #{tpu_custom_call.1} parent=1 // loop_pre_header
      _
    $region3: #{tpu_custom_call.1} parent=1 // loop_header
      %s21 = sphi 0, %s25
      %p22 = scmp.ge.s32.totalorder %s21, 4
      %s28 = sphi 0, %s40
      %s29 = sphi 0, %s36
      %s30 = sphi 0, %s28
      %s31 = sphi 0, %s29
      %s32 = sphi 0, %s30
      %s33 = sphi 0, %s31
      %s43 = sphi 0, %s45
      %s46 = sphi 0, %s43
      %s47 = sphi 0, %s46
      %s63 = sphi 0, %s47
      %s67 = sphi 0, %s67
      %s69 = sphi 0, %s67
      %s70 = sphi 0, %s69
      %s84 = sphi 0, %s70
      %s88 = sphi 0, %s88
      %s90 = sphi 0, %s88
      %s91 = sphi 0, %s90
      %s105 = sphi 0, %s91
      %s109 = sphi 0, %s109
      %s111 = sphi 0, %s109
      %s112 = sphi 0, %s111
      %s126 = sphi 0, %s112
      %s130 = sphi 0, %s130
      %s132 = sphi 0, %s130
      %s133 = sphi 0, %s132
      %s147 = sphi 0, %s133
      %s151 = sphi 0, %s151
      %s153 = sphi 0, %s151
      %s154 = sphi 0, %s153
      %s168 = sphi 0, %s154
      %s172 = sphi 0, %s172
      %s174 = sphi 0, %s172
      %s175 = sphi 0, %s174
      %s189 = sphi 0, %s175
      %s197 = sphi 0, %s199
      %s200 = sphi 0, %s197
      %s201 = sphi 0, %s200
      %s217 = sphi 0, %s201
    $region4: #{tpu_custom_call.1} parent=1 // loop_header_branch
      %24 = sbr.rel (%p22) target = $region8
    $region5: #{tpu_custom_call.1} parent=1 // loop_body
      %s26 = ssub.s32 %s21, 1
      %s27 = ssub.s32 %s21, 2
      %s34 = sadd.s32 1, %s29
      %p35 = scmp.ge.s32.totalorder %s34, 1
      %s36 = scalar_select %p35, 0, %s34
      %s37 = sadd.s32 1, %s28
      %s38 = scalar_select %p35, %s37, %s28
      %p39 = scmp.ge.s32.totalorder %s38, 2
      %s40 = scalar_select %p39, 0, %s38
      %s41 = ssub.s32 %s28, %s40
      %p42 = scmp.eq.s32.totalorder %s41, 0
      %s44 = sadd.s32 %s43, 1
      %s45 = scalar_select %p42, %s43, %s44
      %p48 = pneg %p42
      %p49 = scmp.eq.s32.totalorder %s21, 1
      %p50 = por %p48, %p49
      %p51 = scmp.ne.s32.totalorder %s43, %s46
      %p52 = scmp.eq.s32.totalorder %s21, 0
      %p53 = por %p51, %p52
      %p54 = scmp.ne.s32.totalorder %s43, %s46
      %p55 = scmp.eq.s32.totalorder %s26, 1
      %p56 = por %p54, %p55
      %p57 = scmp.ne.s32.totalorder %s46, %s47
      %p58 = scmp.eq.s32.totalorder %s26, 0
      %p59 = por %p57, %p58
      %p60 = scmp.ne.s32.totalorder %s46, %s47
      %p61 = scmp.eq.s32.totalorder %s27, 1
      %p62 = por %p60, %p61
      %p64 = scmp.ne.s32.totalorder %s47, %s63
      %p65 = scmp.eq.s32.totalorder %s27, 0
      %p66 = por %p64, %p65
      %s68 = sadd.s32 %s67, 1
      %p71 = scmp.eq.s32.totalorder %s21, 1
      %p72 = scmp.ne.s32.totalorder %s67, %s69
      %p73 = scmp.eq.s32.totalorder %s21, 0
      %p74 = por %p72, %p73
      %p75 = scmp.ne.s32.totalorder %s67, %s69
      %p76 = scmp.eq.s32.totalorder %s26, 1
      %p77 = por %p75, %p76
      %p78 = scmp.ne.s32.totalorder %s69, %s70
      %p79 = scmp.eq.s32.totalorder %s26, 0
      %p80 = por %p78, %p79
      %p81 = scmp.ne.s32.totalorder %s69, %s70
      %p82 = scmp.eq.s32.totalorder %s27, 1
      %p83 = por %p81, %p82
      %p85 = scmp.ne.s32.totalorder %s70, %s84
      %p86 = scmp.eq.s32.totalorder %s27, 0
      %p87 = por %p85, %p86
      %s89 = sadd.s32 %s88, 1
      %p92 = scmp.eq.s32.totalorder %s21, 1
      %p93 = scmp.ne.s32.totalorder %s88, %s90
      %p94 = scmp.eq.s32.totalorder %s21, 0
      %p95 = por %p93, %p94
      %p96 = scmp.ne.s32.totalorder %s88, %s90
      %p97 = scmp.eq.s32.totalorder %s26, 1
      %p98 = por %p96, %p97
      %p99 = scmp.ne.s32.totalorder %s90, %s91
      %p100 = scmp.eq.s32.totalorder %s26, 0
      %p101 = por %p99, %p100
      %p102 = scmp.ne.s32.totalorder %s90, %s91
      %p103 = scmp.eq.s32.totalorder %s27, 1
      %p104 = por %p102, %p103
      %p106 = scmp.ne.s32.totalorder %s91, %s105
      %p107 = scmp.eq.s32.totalorder %s27, 0
      %p108 = por %p106, %p107
      %s110 = sadd.s32 %s109, 1
      %p113 = scmp.eq.s32.totalorder %s21, 1
      %p114 = scmp.ne.s32.totalorder %s109, %s111
      %p115 = scmp.eq.s32.totalorder %s21, 0
      %p116 = por %p114, %p115
      %p117 = scmp.ne.s32.totalorder %s109, %s111
      %p118 = scmp.eq.s32.totalorder %s26, 1
      %p119 = por %p117, %p118
      %p120 = scmp.ne.s32.totalorder %s111, %s112
      %p121 = scmp.eq.s32.totalorder %s26, 0
      %p122 = por %p120, %p121
      %p123 = scmp.ne.s32.totalorder %s111, %s112
      %p124 = scmp.eq.s32.totalorder %s27, 1
      %p125 = por %p123, %p124
      %p127 = scmp.ne.s32.totalorder %s112, %s126
      %p128 = scmp.eq.s32.totalorder %s27, 0
      %p129 = por %p127, %p128
      %s131 = sadd.s32 %s130, 1
      %p134 = scmp.eq.s32.totalorder %s21, 1
      %p135 = scmp.ne.s32.totalorder %s130, %s132
      %p136 = scmp.eq.s32.totalorder %s21, 0
      %p137 = por %p135, %p136
      %p138 = scmp.ne.s32.totalorder %s130, %s132
      %p139 = scmp.eq.s32.totalorder %s26, 1
      %p140 = por %p138, %p139
      %p141 = scmp.ne.s32.totalorder %s132, %s133
      %p142 = scmp.eq.s32.totalorder %s26, 0
      %p143 = por %p141, %p142
      %p144 = scmp.ne.s32.totalorder %s132, %s133
      %p145 = scmp.eq.s32.totalorder %s27, 1
      %p146 = por %p144, %p145
      %p148 = scmp.ne.s32.totalorder %s133, %s147
      %p149 = scmp.eq.s32.totalorder %s27, 0
      %p150 = por %p148, %p149
      %s152 = sadd.s32 %s151, 1
      %p155 = scmp.eq.s32.totalorder %s21, 1
      %p156 = scmp.ne.s32.totalorder %s151, %s153
      %p157 = scmp.eq.s32.totalorder %s21, 0
      %p158 = por %p156, %p157
      %p159 = scmp.ne.s32.totalorder %s151, %s153
      %p160 = scmp.eq.s32.totalorder %s26, 1
      %p161 = por %p159, %p160
      %p162 = scmp.ne.s32.totalorder %s153, %s154
      %p163 = scmp.eq.s32.totalorder %s26, 0
      %p164 = por %p162, %p163
      %p165 = scmp.ne.s32.totalorder %s153, %s154
      %p166 = scmp.eq.s32.totalorder %s27, 1
      %p167 = por %p165, %p166
      %p169 = scmp.ne.s32.totalorder %s154, %s168
      %p170 = scmp.eq.s32.totalorder %s27, 0
      %p171 = por %p169, %p170
      %s173 = sadd.s32 %s172, 1
      %p176 = scmp.eq.s32.totalorder %s21, 1
      %p177 = scmp.ne.s32.totalorder %s172, %s174
      %p178 = scmp.eq.s32.totalorder %s21, 0
      %p179 = por %p177, %p178
      %p180 = scmp.ne.s32.totalorder %s172, %s174
      %p181 = scmp.eq.s32.totalorder %s26, 1
      %p182 = por %p180, %p181
      %p183 = scmp.ne.s32.totalorder %s174, %s175
      %p184 = scmp.eq.s32.totalorder %s26, 0
      %p185 = por %p183, %p184
      %p186 = scmp.ne.s32.totalorder %s174, %s175
      %p187 = scmp.eq.s32.totalorder %s27, 1
      %p188 = por %p186, %p187
      %p190 = scmp.ne.s32.totalorder %s175, %s189
      %p191 = scmp.eq.s32.totalorder %s27, 0
      %p192 = por %p190, %p191
      %s193 = ssub.s32 %s28, %s40
      %s194 = ssub.s32 %s29, %s36
      %s195 = sor.u32 %s193, %s194
      %p196 = scmp.eq.s32.totalorder %s195, 0
      %s198 = sadd.s32 %s197, 1
      %s199 = scalar_select %p196, %s197, %s198
      %p202 = pneg %p196
      %p203 = scmp.eq.s32.totalorder %s21, 1
      %p204 = por %p202, %p203
      %p205 = scmp.ne.s32.totalorder %s197, %s200
      %p206 = scmp.eq.s32.totalorder %s21, 0
      %p207 = por %p205, %p206
      %p208 = scmp.ne.s32.totalorder %s197, %s200
      %p209 = scmp.eq.s32.totalorder %s26, 1
      %p210 = por %p208, %p209
      %p211 = scmp.ne.s32.totalorder %s200, %s201
      %p212 = scmp.eq.s32.totalorder %s26, 0
      %p213 = por %p211, %p212
      %p214 = scmp.ne.s32.totalorder %s200, %s201
      %p215 = scmp.eq.s32.totalorder %s27, 1
      %p216 = por %p214, %p215
      %p218 = scmp.ne.s32.totalorder %s201, %s217
      %p219 = scmp.eq.s32.totalorder %s27, 0
      %p220 = por %p218, %p219
      %p221 = scmp.le.s32.totalorder 1, %s21
      %p222 = scmp.lt.s32.totalorder %s21, 3
      %p223 = pnand %p221, %p222
      %p224 = pneg %p223
      // Predicated region
      $region9: #{tpu_custom_call.1} parent=5 // pred_check
        _
      $region10: #{tpu_custom_call.1} parent=5 // pred_check_branch
        %226 = sbr.rel (%p223) target = $region12
      $region11: #{tpu_custom_call.1} parent=5 // pred_region
        %s227 = ssub.s32 %s21, 1
        // Predicated region
        $region13: #{tpu_custom_call.1} parent=11 // pred_check
          %p228 = pneg %p80
        $region14: #{tpu_custom_call.1} parent=11 // pred_check_branch
          %230 = sbr.rel (%p228) target = $region16
        $region15: #{tpu_custom_call.1} parent=11 // pred_region
          %232 = vsyncadd [#allocation8], 0
          %s234 = sshll.u32 %s1, 4
          %s235 = int_to_ptr.hbm [resolvable:$true] %s234
          %s236 = sshll.u32 [#allocation7], 4
          %s237 = int_to_ptr.vmem [resolvable:$true] %s236
          %239 = dma.hbm_to_vmem [thread:$0]  %s235, 16, %s237, [#allocation8]
        $region16: #{tpu_custom_call.1} parent=11 // pred_fallthru
          _
        // Predicated region
        $region17: #{tpu_custom_call.1} parent=11 // pred_check
          %p240 = pneg %p101
        $region18: #{tpu_custom_call.1} parent=11 // pred_check_branch
          %242 = sbr.rel (%p240) target = $region20
        $region19: #{tpu_custom_call.1} parent=11 // pred_region
          _
        $region20: #{tpu_custom_call.1} parent=11 // pred_fallthru
          _
        // Predicated region
        $region21: #{tpu_custom_call.1} parent=11 // pred_check
          %p243 = pneg %p122
        $region22: #{tpu_custom_call.1} parent=11 // pred_check_branch
          %245 = sbr.rel (%p243) target = $region24
        $region23: #{tpu_custom_call.1} parent=11 // pred_region
          %247 = vsyncadd [#allocation8], 0
          %s248 = sshll.u32 %s3, 4
          %s249 = int_to_ptr.hbm [resolvable:$true] %s248
          %s250 = sshll.u32 [#allocation9], 4
          %s251 = int_to_ptr.vmem [resolvable:$true] %s250
          %256 = dma.hbm_to_vmem [thread:$0]  %s249, 256, %s251, [#allocation8], 64, 64, 4
        $region24: #{tpu_custom_call.1} parent=11 // pred_fallthru
          _
        // Predicated region
        $region25: #{tpu_custom_call.1} parent=11 // pred_check
          %p257 = pneg %p143
        $region26: #{tpu_custom_call.1} parent=11 // pred_check_branch
          %259 = sbr.rel (%p257) target = $region28
        $region27: #{tpu_custom_call.1} parent=11 // pred_region
          _
        $region28: #{tpu_custom_call.1} parent=11 // pred_fallthru
          _
        // Predicated region
        $region29: #{tpu_custom_call.1} parent=11 // pred_check
          %p260 = pneg %p164
        $region30: #{tpu_custom_call.1} parent=11 // pred_check_branch
          %262 = sbr.rel (%p260) target = $region32
        $region31: #{tpu_custom_call.1} parent=11 // pred_region
          %264 = vsyncadd [#allocation11], 0
          %s265 = sshll.u32 %s5, 4
          %s266 = int_to_ptr.hbm [resolvable:$true] %s265
          %s267 = sshll.u32 [#allocation10], 4
          %s268 = int_to_ptr.vmem [resolvable:$true] %s267
          %273 = dma.hbm_to_vmem [thread:$0]  %s266, 256, %s268, [#allocation11], 64, 64, 4
        $region32: #{tpu_custom_call.1} parent=11 // pred_fallthru
          _
        // Predicated region
        $region33: #{tpu_custom_call.1} parent=11 // pred_check
          %p274 = pneg %p185
        $region34: #{tpu_custom_call.1} parent=11 // pred_check_branch
          %276 = sbr.rel (%p274) target = $region36
        $region35: #{tpu_custom_call.1} parent=11 // pred_region
          _
        $region36: #{tpu_custom_call.1} parent=11 // pred_fallthru
          _
      $region12: #{tpu_custom_call.1} parent=5 // pred_fallthru
        _
      %p277 = scmp.lt.s32.totalorder %s21, 2
      // Predicated region
      $region37: #{tpu_custom_call.1} parent=5 // pred_check
        %p278 = pneg %p277
      $region38: #{tpu_custom_call.1} parent=5 // pred_check_branch
        %280 = sbr.rel (%p278) target = $region40
      $region39: #{tpu_custom_call.1} parent=5 // pred_region
        // Predicated region
        $region41: #{tpu_custom_call.1} parent=39 // pred_check
          %p281 = pneg %p53
        $region42: #{tpu_custom_call.1} parent=39 // pred_check_branch
          %283 = sbr.rel (%p281) target = $region44
        $region43: #{tpu_custom_call.1} parent=39 // pred_region
          %s284 = sand.u32 %s43, 1
          %s285 = scalar_lea.sflag [#allocation5], %s284
          %s286 = sand.u32 %s43, 1
          %s287 = smul.addr %s286, 8
          %s288 = scalar_lea.vmem [#allocation4], %s287
          %290 = vsyncadd %s285, 0
          %s291 = smul.addr %s28, 8
          %s292 = scalar_lea.hbm %s0, %s291
          %s294 = sshll.u32 %s292, 4
          %s295 = int_to_ptr.hbm [resolvable:$true] %s294
          %s296 = sshll.u32 %s288, 4
          %s297 = int_to_ptr.vmem [resolvable:$true] %s296
          %299 = dma.hbm_to_vmem [thread:$0]  %s295, 128, %s297, %s285
        $region44: #{tpu_custom_call.1} parent=39 // pred_fallthru
          _
      $region40: #{tpu_custom_call.1} parent=5 // pred_fallthru
        _
      %p300 = scmp.le.s32.totalorder 1, %s21
      %p301 = scmp.lt.s32.totalorder %s21, 3
      %p302 = pnand %p300, %p301
      %p303 = pneg %p302
      // Predicated region
      $region45: #{tpu_custom_call.1} parent=5 // pred_check
        _
      $region46: #{tpu_custom_call.1} parent=5 // pred_check_branch
        %305 = sbr.rel (%p302) target = $region48
      $region47: #{tpu_custom_call.1} parent=5 // pred_region
        %s306 = ssub.s32 %s21, 1
        %s307 = sand.u32 %s46, 1
        %s308 = scalar_lea.sflag [#allocation5], %s307
        %s309 = sand.u32 %s46, 1
        %s310 = smul.addr %s309, 8
        %s311 = scalar_lea.vmem [#allocation4], %s310
        // Predicated region
        $region49: #{tpu_custom_call.1} parent=47 // pred_check
          %p312 = pneg %p59
        $region50: #{tpu_custom_call.1} parent=47 // pred_check_branch
          %314 = sbr.rel (%p312) target = $region52
        $region51: #{tpu_custom_call.1} parent=47 // pred_region
          %316 = dma.done %s308, 128
        $region52: #{tpu_custom_call.1} parent=47 // pred_fallthru
          _
        // Predicated region
        $region53: #{tpu_custom_call.1} parent=47 // pred_check
          %p317 = pneg %p80
        $region54: #{tpu_custom_call.1} parent=47 // pred_check_branch
          %319 = sbr.rel (%p317) target = $region56
        $region55: #{tpu_custom_call.1} parent=47 // pred_region
          %321 = dma.done [#allocation8], 16
        $region56: #{tpu_custom_call.1} parent=47 // pred_fallthru
          _
        // Predicated region
        $region57: #{tpu_custom_call.1} parent=47 // pred_check
          %p322 = pneg %p122
        $region58: #{tpu_custom_call.1} parent=47 // pred_check_branch
          %324 = sbr.rel (%p322) target = $region60
        $region59: #{tpu_custom_call.1} parent=47 // pred_region
          %326 = dma.done [#allocation8], 256
        $region60: #{tpu_custom_call.1} parent=47 // pred_fallthru
          _
        // Predicated region
        $region61: #{tpu_custom_call.1} parent=47 // pred_check
          %p327 = pneg %p164
        $region62: #{tpu_custom_call.1} parent=47 // pred_check_branch
          %329 = sbr.rel (%p327) target = $region64
        $region63: #{tpu_custom_call.1} parent=47 // pred_region
          %331 = dma.done [#allocation11], 256
        $region64: #{tpu_custom_call.1} parent=47 // pred_fallthru
          _
        %s332 = sand.u32 %s46, 1
        %s333 = scalar_lea.sflag [#allocation5], %s332
        %s334 = sand.u32 %s46, 1
        %s335 = smul.addr %s334, 8
        %s336 = scalar_lea.vmem [#allocation4], %s335
        %p337 = pneg %p59
        %p338 = pneg %p56
        %p339 = pneg %p80
        %p340 = pneg %p77
        %p341 = pneg %p101
        %p342 = pneg %p98
        %p343 = pneg %p122
        %p344 = pneg %p119
        %p345 = pneg %p143
        %p346 = pneg %p140
        %p347 = pneg %p164
        %p348 = pneg %p161
        %p349 = pneg %p185
        %p350 = pneg %p182
        %p351 = pneg %p213
        %p352 = pneg %p210
        %s353 = sand.u32 %s200, 1
        %s354 = scalar_lea.sflag [#allocation6], %s353
        %s355 = sand.u32 %s200, 1
        %s356 = smul.addr %s355, 8
        %s357 = scalar_lea.vmem [#allocation12], %s356
        %p359 = scmp.eq.s32.totalorder %s31, 0
        // Predicated region
        $region65: #{tpu_custom_call.1} parent=47 // pred_check
          %p360 = pneg %p359
        $region66: #{tpu_custom_call.1} parent=47 // pred_check_branch
          %362 = sbr.rel (%p360) target = $region68
        $region67: #{tpu_custom_call.1} parent=47 // pred_region
          %v363 = vld [vmem:[%s311] sm:$0xff]
          %vm364 = vcmask 261120
          %v365 = vsel %vm364, %v363, 0.0
          %366 = vadd.xlane.f32.xlu0 %v365
          %v367 = vpop.xlane.xlu0 %366
          %v368 = vrcp.pop 32.0
          %v369 = vmul.f32 32.0, %v368
          %v370 = vsub.f32 1.0, %v369
          %v371 = vmul.f32 %v368, %v370
          %v372 = vadd.f32 %v368, %v371
          %vm373 = vweird.f32 %v368
          %v374 = vsel %vm373, %v368, %v372
          %v375 = vmul.f32 %v367, %v374
          %v376 = vsub.f32 %v363, %v375
          %v377 = vmul.f32 %v376, %v376
          %v378 = vsel %vm364, %v377, 0.0
          %379 = vadd.xlane.f32.xlu0 %v378
          %v380 = vpop.xlane.xlu0 %379
          %v381 = vmul.f32 %v380, %v374
          %v382 = vadd.f32 %v381, 1e-06
          %v383 = vrsqrt.pop %v382
          %v384 = vmul.f32 %v383, %v382
          %v385 = vmul.f32 %v384, %v383
          %v386 = vmul.f32 0.5, %v385
          %v387 = vsub.f32 1.5, %v386
          %v388 = vmul.f32 %v383, %v387
          %vm389 = vweird.f32 %v382
          %vm390 = vweird.f32 %v383
          %vm391 = vmor %vm389, %vm390
          %v392 = vsel %vm391, %v383, %v388
          %v393 = vmul.f32 %v376, %v392
          %v394 = vld [vmem:[#allocation7] sm:$0x1]
          %v396 = vperm.slane %v394, 0
          %v398 = vmul.f32 %v393, %v396
          %v399 = vld [vmem:[%s2] sm:$0x1]
          %v401 = vperm.slane %v399, 0
          %v403 = vadd.f32 %v398, %v401
          %v404 = vpack.c.bf16 %v403, %v403
          %v405 = vld [vmem:[#allocation9] sm:$0xf]
          %v406 = vld [vmem:[#allocation9 + $0x4] sm:$0xf]
          %v407 = vld [vmem:[#allocation9 + $0x8] sm:$0xf]
          %v408 = vld [vmem:[#allocation9 + $0xc] sm:$0xf]
          %v409 = vld [vmem:[%s4] sm:$0x1]
          %v411 = vperm.slane %v409, 0
          %v417 = vunpack.c.l.b16 %v405
          %v418 = vunpack.c.l.b16 %v406
          %v419 = vunpack.c.l.b16 %v407
          %v420 = vunpack.c.l.b16 %v408
          %v421 = vpack.c.b16 %v418, %v417
          %v422 = vpack.c.b16 %v420, %v419
          %v426 = vsel %vm364, %v404, 0
          %428 = vmatpush.bf16.msra.mxu0 0
          %429 = vmatpush.bf16.msra.mxu0 0
          %430 = vmatpush.bf16.msra.mxu0 0
          %431 = vmatpush.bf16.msra.mxu0 0
          %432 = vmatpush.bf16.msra.mxu0 0
          %433 = vmatpush.bf16.msra.mxu0 0
          %434 = vmatpush.bf16.msra.mxu0 %v422
          %435 = vmatpush.bf16.msra.mxu0 %v421
          %436 = vmatmul.bf16.gmra.mxu0 %v426
          %v437 = vpop.f32.mrf.mxu0
          %v438 = vadd.f32 %v411, %v437
          %v439 = vpop.f32.mrf.mxu0
          %440 = vdwg.mxu0
          %v441 = vpack.c.bf16 %v438, %v438
          %vm442 = vcmask 781312
          %443 = vst.msk [vmem:[#allocation2] sm:$0xf] %vm442, %v441
        $region68: #{tpu_custom_call.1} parent=47 // pred_fallthru
          _
        %s444 = smul.u32 %s31, 8
        %s445 = sshra.s32 %s444, 3
        %s446 = sand.u32 %s444, 7
        %s447 = smul.addr %s445, 4
        %s448 = scalar_lea.vmem [#allocation2], %s447
        %v449 = vld [vmem:[%s448] sm:$0xf]
        %v450 = vld [vmem:[#allocation2] sm:$0xf]
        %v452 = vunpack.c.l.b16 %v450
        %v453 = vpack.c.b16 %v452, %v452
        %454 = vrot.lane.b32.xlu0 %v453, 96
        %v455 = vpop.permute.xlu0 %454
        %vm456 = vcmask 64512
        %v458 = vsel %vm456, %v449, 0
        %v461 = vsel %vm456, %v455, 0
        %463 = vmatpush.bf16.xpose.msra.mxu0 0
        %464 = vmatpush.bf16.xpose.msra.mxu0 0
        %465 = vmatpush.bf16.xpose.msra.mxu0 0
        %466 = vmatpush.bf16.xpose.msra.mxu0 0
        %467 = vmatpush.bf16.xpose.msra.mxu0 0
        %468 = vmatpush.bf16.xpose.msra.mxu0 0
        %469 = vmatpush.bf16.xpose.msra.mxu0 0
        %470 = vmatpush.bf16.xpose.msra.mxu0 %v461
        %471 = vmatmul.bf16.gmra.mxu0 %v458
        %v472 = vpop.f32.mrf.mxu0
        %v473 = vadd.f32 0.0, %v472
        %v474 = vpop.f32.mrf.mxu0
        %475 = vdwg.mxu0
        %v476 = vmax.f32 %v473, -10000.0
        %v477 = vmin.f32 %v476, 10000.0
        %v478 = vsel %vm456, %v477, -inf
        %479 = vmax.xlane.f32.xlu0 %v478
        %v480 = vpop.xlane.xlu0 %479
        %v481 = vsub.f32 %v477, %v480
        %v482 = vmul.f32 %v481, 1.442695
        %v483 = vpow.pop %v482
        %v484 = vsel %vm456, %v483, 0.0
        %485 = vadd.xlane.f32.xlu0 %v484
        %v486 = vpop.xlane.xlu0 %485
        %v487 = vrcp.pop %v486
        %v488 = vpack.c.bf16 %v483, %v483
        %489 = vrot.lane.b32.xlu0 %v453, 64
        %v490 = vpop.permute.xlu0 %489
        %v492 = vsel %vm456, %v488, 0
        %vm494 = vcmask 1043456
        %v496 = vsel %vm494, %v490, 0
        %498 = vmatpush.bf16.msra.mxu0 0
        %499 = vmatpush.bf16.msra.mxu0 0
        %500 = vmatpush.bf16.msra.mxu0 0
        %501 = vmatpush.bf16.msra.mxu0 0
        %502 = vmatpush.bf16.msra.mxu0 0
        %503 = vmatpush.bf16.msra.mxu0 0
        %504 = vmatpush.bf16.msra.mxu0 0
        %505 = vmatpush.bf16.msra.mxu0 %v496
        %506 = vmatmul.bf16.gmra.mxu0 %v492
        %v507 = vpop.f32.mrf.mxu0
        %v508 = vadd.f32 0.0, %v507
        %v509 = vpop.f32.mrf.mxu0
        %510 = vdwg.mxu0
        %v511 = vmul.f32 %v508, %v487
        %v512 = vpack.c.bf16 %v511, %v511
        %vm513 = vcmask 60416
        %514 = vst.msk [vmem:[#allocation3] sm:$0xf] %vm513, %v512
        %v515 = vld [vmem:[%s448] sm:$0xf]
        %v516 = vld [vmem:[#allocation2] sm:$0xf]
        %v518 = vunpack.c.l.b16 %v515
        %v519 = vpack.c.b16 %v518, %v518
        %520 = vrot.lane.b32.xlu0 %v519, 120
        %v521 = vpop.permute.xlu0 %520
        %v523 = vunpack.c.l.b16 %v516
        %v524 = vpack.c.b16 %v523, %v523
        %525 = vrot.lane.b32.xlu0 %v524, 88
        %v526 = vpop.permute.xlu0 %525
        %v528 = vsel %vm456, %v521, 0
        %v531 = vsel %vm456, %v526, 0
        %533 = vmatpush.bf16.xpose.msra.mxu0 0
        %534 = vmatpush.bf16.xpose.msra.mxu0 0
        %535 = vmatpush.bf16.xpose.msra.mxu0 0
        %536 = vmatpush.bf16.xpose.msra.mxu0 0
        %537 = vmatpush.bf16.xpose.msra.mxu0 0
        %538 = vmatpush.bf16.xpose.msra.mxu0 0
        %539 = vmatpush.bf16.xpose.msra.mxu0 0
        %540 = vmatpush.bf16.xpose.msra.mxu0 %v531
        %541 = vmatmul.bf16.gmra.mxu0 %v528
        %v542 = vpop.f32.mrf.mxu0
        %v543 = vadd.f32 0.0, %v542
        %v544 = vpop.f32.mrf.mxu0
        %545 = vdwg.mxu0
        %v546 = vmax.f32 %v543, -10000.0
        %v547 = vmin.f32 %v546, 10000.0
        %v548 = vsel %vm456, %v547, -inf
        %549 = vmax.xlane.f32.xlu0 %v548
        %v550 = vpop.xlane.xlu0 %549
        %v551 = vsub.f32 %v547, %v550
        %v552 = vmul.f32 %v551, 1.442695
        %v553 = vpow.pop %v552
        %v554 = vsel %vm456, %v553, 0.0
        %555 = vadd.xlane.f32.xlu0 %v554
        %v556 = vpop.xlane.xlu0 %555
        %v557 = vrcp.pop %v556
        %v558 = vpack.c.bf16 %v553, %v553
        %559 = vrot.lane.b32.xlu0 %v524, 56
        %v560 = vpop.permute.xlu0 %559
        %v562 = vsel %vm456, %v558, 0
        %v565 = vsel %vm494, %v560, 0
        %567 = vmatpush.bf16.msra.mxu0 0
        %568 = vmatpush.bf16.msra.mxu0 0
        %569 = vmatpush.bf16.msra.mxu0 0
        %570 = vmatpush.bf16.msra.mxu0 0
        %571 = vmatpush.bf16.msra.mxu0 0
        %572 = vmatpush.bf16.msra.mxu0 0
        %573 = vmatpush.bf16.msra.mxu0 0
        %574 = vmatpush.bf16.msra.mxu0 %v565
        %575 = vmatmul.bf16.gmra.mxu0 %v562
        %v576 = vpop.f32.mrf.mxu0
        %v577 = vadd.f32 0.0, %v576
        %v578 = vpop.f32.mrf.mxu0
        %579 = vdwg.mxu0
        %v580 = vmul.f32 %v577, %v557
        %v581 = vpack.c.bf16 %v580, %v580
        %583 = vrot.lane.b32.xlu0 %v581, 8
        %v584 = vpop.permute.xlu0 %583
        %vm586 = vcmask 126016
        %587 = vst.msk [vmem:[#allocation3] sm:$0xf] %vm586, %v584
        %v588 = vld [vmem:[%s448] sm:$0xf]
        %v589 = vld [vmem:[#allocation2] sm:$0xf]
        %v591 = vunpack.c.l.b16 %v588
        %v592 = vpack.c.b16 %v591, %v591
        %593 = vrot.lane.b32.xlu0 %v592, 112
        %v594 = vpop.permute.xlu0 %593
        %v596 = vunpack.c.l.b16 %v589
        %v597 = vpack.c.b16 %v596, %v596
        %598 = vrot.lane.b32.xlu0 %v597, 80
        %v599 = vpop.permute.xlu0 %598
        %v601 = vsel %vm456, %v594, 0
        %v604 = vsel %vm456, %v599, 0
        %606 = vmatpush.bf16.xpose.msra.mxu0 0
        %607 = vmatpush.bf16.xpose.msra.mxu0 0
        %608 = vmatpush.bf16.xpose.msra.mxu0 0
        %609 = vmatpush.bf16.xpose.msra.mxu0 0
        %610 = vmatpush.bf16.xpose.msra.mxu0 0
        %611 = vmatpush.bf16.xpose.msra.mxu0 0
        %612 = vmatpush.bf16.xpose.msra.mxu0 0
        %613 = vmatpush.bf16.xpose.msra.mxu0 %v604
        %614 = vmatmul.bf16.gmra.mxu0 %v601
        %v615 = vpop.f32.mrf.mxu0
        %v616 = vadd.f32 0.0, %v615
        %v617 = vpop.f32.mrf.mxu0
        %618 = vdwg.mxu0
        %v619 = vmax.f32 %v616, -10000.0
        %v620 = vmin.f32 %v619, 10000.0
        %v621 = vsel %vm456, %v620, -inf
        %622 = vmax.xlane.f32.xlu0 %v621
        %v623 = vpop.xlane.xlu0 %622
        %v624 = vsub.f32 %v620, %v623
        %v625 = vmul.f32 %v624, 1.442695
        %v626 = vpow.pop %v625
        %v627 = vsel %vm456, %v626, 0.0
        %628 = vadd.xlane.f32.xlu0 %v627
        %v629 = vpop.xlane.xlu0 %628
        %v630 = vrcp.pop %v629
        %v631 = vpack.c.bf16 %v626, %v626
        %632 = vrot.lane.b32.xlu0 %v597, 48
        %v633 = vpop.permute.xlu0 %632
        %v635 = vsel %vm456, %v631, 0
        %v638 = vsel %vm494, %v633, 0
        %640 = vmatpush.bf16.msra.mxu0 0
        %641 = vmatpush.bf16.msra.mxu0 0
        %642 = vmatpush.bf16.msra.mxu0 0
        %643 = vmatpush.bf16.msra.mxu0 0
        %644 = vmatpush.bf16.msra.mxu0 0
        %645 = vmatpush.bf16.msra.mxu0 0
        %646 = vmatpush.bf16.msra.mxu0 0
        %647 = vmatpush.bf16.msra.mxu0 %v638
        %648 = vmatmul.bf16.gmra.mxu0 %v635
        %v649 = vpop.f32.mrf.mxu0
        %v650 = vadd.f32 0.0, %v649
        %v651 = vpop.f32.mrf.mxu0
        %652 = vdwg.mxu0
        %v653 = vmul.f32 %v650, %v630
        %v654 = vpack.c.bf16 %v653, %v653
        %656 = vrot.lane.b32.xlu0 %v654, 16
        %v657 = vpop.permute.xlu0 %656
        %vm659 = vcmask 191616
        %660 = vst.msk [vmem:[#allocation3] sm:$0xf] %vm659, %v657
        %v661 = vld [vmem:[%s448] sm:$0xf]
        %v662 = vld [vmem:[#allocation2] sm:$0xf]
        %v664 = vunpack.c.l.b16 %v661
        %v665 = vpack.c.b16 %v664, %v664
        %666 = vrot.lane.b32.xlu0 %v665, 104
        %v667 = vpop.permute.xlu0 %666
        %v669 = vunpack.c.l.b16 %v662
        %v670 = vpack.c.b16 %v669, %v669
        %671 = vrot.lane.b32.xlu0 %v670, 72
        %v672 = vpop.permute.xlu0 %671
        %v674 = vsel %vm456, %v667, 0
        %v677 = vsel %vm456, %v672, 0
        %679 = vmatpush.bf16.xpose.msra.mxu0 0
        %680 = vmatpush.bf16.xpose.msra.mxu0 0
        %681 = vmatpush.bf16.xpose.msra.mxu0 0
        %682 = vmatpush.bf16.xpose.msra.mxu0 0
        %683 = vmatpush.bf16.xpose.msra.mxu0 0
        %684 = vmatpush.bf16.xpose.msra.mxu0 0
        %685 = vmatpush.bf16.xpose.msra.mxu0 0
        %686 = vmatpush.bf16.xpose.msra.mxu0 %v677
        %687 = vmatmul.bf16.gmra.mxu0 %v674
        %v688 = vpop.f32.mrf.mxu0
        %v689 = vadd.f32 0.0, %v688
        %v690 = vpop.f32.mrf.mxu0
        %691 = vdwg.mxu0
        %v692 = vmax.f32 %v689, -10000.0
        %v693 = vmin.f32 %v692, 10000.0
        %v694 = vsel %vm456, %v693, -inf
        %695 = vmax.xlane.f32.xlu0 %v694
        %v696 = vpop.xlane.xlu0 %695
        %v697 = vsub.f32 %v693, %v696
        %v698 = vmul.f32 %v697, 1.442695
        %v699 = vpow.pop %v698
        %v700 = vsel %vm456, %v699, 0.0
        %701 = vadd.xlane.f32.xlu0 %v700
        %v702 = vpop.xlane.xlu0 %701
        %v703 = vrcp.pop %v702
        %v704 = vpack.c.bf16 %v699, %v699
        %705 = vrot.lane.b32.xlu0 %v670, 40
        %v706 = vpop.permute.xlu0 %705
        %v708 = vsel %vm456, %v704, 0
        %v711 = vsel %vm494, %v706, 0
        %713 = vmatpush.bf16.msra.mxu0 0
        %714 = vmatpush.bf16.msra.mxu0 0
        %715 = vmatpush.bf16.msra.mxu0 0
        %716 = vmatpush.bf16.msra.mxu0 0
        %717 = vmatpush.bf16.msra.mxu0 0
        %718 = vmatpush.bf16.msra.mxu0 0
        %719 = vmatpush.bf16.msra.mxu0 0
        %720 = vmatpush.bf16.msra.mxu0 %v711
        %721 = vmatmul.bf16.gmra.mxu0 %v708
        %v722 = vpop.f32.mrf.mxu0
        %v723 = vadd.f32 0.0, %v722
        %v724 = vpop.f32.mrf.mxu0
        %725 = vdwg.mxu0
        %v726 = vmul.f32 %v723, %v703
        %v727 = vpack.c.bf16 %v726, %v726
        %729 = vrot.lane.b32.xlu0 %v727, 24
        %v730 = vpop.permute.xlu0 %729
        %vm732 = vcmask 257216
        %733 = vst.msk [vmem:[#allocation3] sm:$0xf] %vm732, %v730
        %v734 = vld [vmem:[#allocation3] sm:$0xf]
        %v735 = vld [vmem:[#allocation10] sm:$0xf]
        %v736 = vld [vmem:[#allocation10 + $0x4] sm:$0xf]
        %v737 = vld [vmem:[#allocation10 + $0x8] sm:$0xf]
        %v738 = vld [vmem:[#allocation10 + $0xc] sm:$0xf]
        %v739 = vld [vmem:[%s6] sm:$0x1]
        %v741 = vperm.slane %v739, 0
        %v747 = vunpack.c.l.b16 %v735
        %v748 = vunpack.c.l.b16 %v736
        %v749 = vunpack.c.l.b16 %v737
        %v750 = vunpack.c.l.b16 %v738
        %v751 = vpack.c.b16 %v748, %v747
        %v752 = vpack.c.b16 %v750, %v749
        %vm755 = vcmask 261120
        %v757 = vsel %vm755, %v734, 0
        %759 = vmatpush.bf16.msra.mxu0 0
        %760 = vmatpush.bf16.msra.mxu0 0
        %761 = vmatpush.bf16.msra.mxu0 0
        %762 = vmatpush.bf16.msra.mxu0 0
        %763 = vmatpush.bf16.msra.mxu0 0
        %764 = vmatpush.bf16.msra.mxu0 0
        %765 = vmatpush.bf16.msra.mxu0 %v752
        %766 = vmatpush.bf16.msra.mxu0 %v751
        %767 = vmatmul.bf16.gmra.mxu0 %v757
        %v768 = vpop.f32.mrf.mxu0
        %v769 = vadd.f32 %v741, %v768
        %v770 = vpop.f32.mrf.mxu0
        %771 = vdwg.mxu0
        %772 = vst.msk [vmem:[%s357] sm:$0xff] %vm755, %v769
        %s773 = sand.u32 %s200, 1
        %s774 = scalar_lea.sflag [#allocation6], %s773
        %s775 = sand.u32 %s200, 1
        %s776 = smul.addr %s775, 8
        %s777 = scalar_lea.vmem [#allocation12], %s776
        // Predicated region
        $region69: #{tpu_custom_call.1} parent=47 // pred_check
          %p778 = pneg %p210
        $region70: #{tpu_custom_call.1} parent=47 // pred_check_branch
          %780 = sbr.rel (%p778) target = $region72
        $region71: #{tpu_custom_call.1} parent=47 // pred_region
          %782 = vsyncadd %s774, 0
          %s783 = sadd.s32 %s31, %s30
          %s784 = smul.addr %s783, 8
          %s785 = scalar_lea.hbm %s7, %s784
          %s787 = sshll.u32 %s777, 4
          %s788 = int_to_ptr.vmem [resolvable:$true] %s787
          %s789 = sshll.u32 %s785, 4
          %s790 = int_to_ptr.hbm [resolvable:$true] %s789
          %792 = dma.vmem_to_hbm [thread:$0]  %s788, 128, %s790, %s774
        $region72: #{tpu_custom_call.1} parent=47 // pred_fallthru
          _
      $region48: #{tpu_custom_call.1} parent=5 // pred_fallthru
        _
      %p793 = scmp.le.s32.totalorder 2, %s21
      // Predicated region
      $region73: #{tpu_custom_call.1} parent=5 // pred_check
        %p794 = pneg %p793
      $region74: #{tpu_custom_call.1} parent=5 // pred_check_branch
        %796 = sbr.rel (%p794) target = $region76
      $region75: #{tpu_custom_call.1} parent=5 // pred_region
        %s797 = ssub.s32 %s21, 2
        // Predicated region
        $region77: #{tpu_custom_call.1} parent=75 // pred_check
          %p798 = pneg %p216
        $region78: #{tpu_custom_call.1} parent=75 // pred_check_branch
          %800 = sbr.rel (%p798) target = $region80
        $region79: #{tpu_custom_call.1} parent=75 // pred_region
          %s801 = sand.u32 %s201, 1
          %s802 = scalar_lea.sflag [#allocation6], %s801
          %s803 = sand.u32 %s201, 1
          %s804 = smul.addr %s803, 8
          %s805 = scalar_lea.vmem [#allocation12], %s804
          %807 = dma.done %s802, 128
        $region80: #{tpu_custom_call.1} parent=75 // pred_fallthru
          _
      $region76: #{tpu_custom_call.1} parent=5 // pred_fallthru
        _
    $region6: #{tpu_custom_call.1} parent=1 // loop_footer
      %s25 = sadd.s32 1, %s21
    $region7: #{tpu_custom_call.1} parent=1 // loop_footer_branch
      %20 = sbr.rel target = $region3
    $region8: #{tpu_custom_call.1} parent=1 // loop_exit
      _
    %808 = vsyncpa [#allocation5], 1
    %s809 = scalar_lea.sflag [#allocation5], 1
    %810 = vsyncpa %s809, 1
    %811 = vsyncpa [#allocation8], 1
    %812 = vsyncpa [#allocation11], 1
    %813 = vsyncpa [#allocation6], 1
    %s814 = scalar_lea.sflag [#allocation6], 1
    %815 = vsyncpa %s814, 1

</llo_original>
